<compile_context>
chip_gen: v6e
topology: v6e:2x2x1
jax: 0.10.0
libtpu: 0.0.40
codegen_flags: <defaults>
</compile_context>

<pallas_src>
import jax
import jax.numpy as jnp
from jax import lax
from jax.experimental import pallas as pl
from jax.experimental.pallas import tpu as pltpu

_LANE = 128


def _round_up(n, m):
    return (n + m - 1) // m * m


def _pad_axis(a, axis, new_size):
    pad = [(0, 0)] * a.ndim
    pad[axis] = (0, new_size - a.shape[axis])
    return jnp.pad(a, pad)


def _pad_gate_rows(w, H, Hp):
    """w: (4*H, X) -> (4*Hp, X), zero-padding each of the 4 gate blocks independently."""
    X = w.shape[1]
    w4 = w.reshape(4, H, X)
    w4 = _pad_axis(w4, 1, Hp)
    return w4.reshape(4 * Hp, X)


def _dkt_kernel(x_ref, wih_ref, whh_ref, b_ref, h0_ref, c0_ref, wdec_ref, bdec_ref,
                hseq_ref, dec_ref, hN_ref, cN_ref, xg_sc):
    """Single-TC DKT forward over one batch block.

    x_ref:    (T, Bb, I)    time-major inputs (bf16)
    wih_ref:  (I, 4Hp)      W_ih^T (bf16, per-gate zero padded)
    whh_ref:  (Hp, 4Hp)     W_hh^T (bf16, zero padded)
    b_ref:    (1, 4Hp)      b_ih + b_hh (f32)
    h0_ref/c0_ref: (Bb, Hp) initial state (f32)
    wdec_ref: (Hp, Sp)      W_dec^T (bf16)      bdec_ref: (1, Sp) (f32)
    hseq_ref: (T, Bb, Hp)   hidden sequence output (f32, time-major)
    dec_ref:  (T, Bb, Sp)   decoded output (f32, time-major)
    xg_sc:    (T, Bb, 4Hp)  precomputed gate inputs (f32 scratch)
    """
    T, Bb, I = x_ref.shape
    Hp = h0_ref.shape[-1]
    Sp = wdec_ref.shape[-1]

    # ---- Prologue: input projection for ALL timesteps in one bf16 MXU matmul ----
    x_all = x_ref[...].reshape(T * Bb, I)
    xg = jnp.dot(x_all, wih_ref[...],
                 preferred_element_type=jnp.float32) + b_ref[...]
    xg_sc[...] = xg.reshape(T, Bb, 4 * Hp)

    # Loop-invariant recurrent weight: load once, let Mosaic keep it resident.
    whh = whh_ref[...]

    # ---- Recurrence: only h_prev @ W_hh^T stays inside the sequential loop ----
    def step(t, carry):
        h_prev, c_prev = carry                      # f32, live in vregs
        gates = xg_sc[t] + jnp.dot(h_prev.astype(whh.dtype), whh,
                                   preferred_element_type=jnp.float32)   # (Bb, 4Hp)

        # One EUP sigmoid pass covers i, f, o; tanh only on the g slice.
        sig = jax.nn.sigmoid(gates)
        i_g = sig[:, 0 * Hp:1 * Hp]
        f_g = sig[:, 1 * Hp:2 * Hp]
        o_g = sig[:, 3 * Hp:4 * Hp]
        g_g = jnp.tanh(gates[:, 2 * Hp:3 * Hp])

        c_new = f_g * c_prev + i_g * g_g
        h_new = o_g * jnp.tanh(c_new)

        hseq_ref[t] = h_new                          # VMEM-resident output block
        return (h_new, c_new)

    h_last, c_last = lax.fori_loop(
        0, T, step, (h0_ref[...], c0_ref[...]), unroll=min(T, 8))

    # ---- Epilogue: decode the whole hidden sequence with one bf16 MXU matmul ----
    hs = hseq_ref[...].reshape(T * Bb, Hp).astype(wdec_ref.dtype)
    dec = jnp.dot(hs, wdec_ref[...],
                  preferred_element_type=jnp.float32) + bdec_ref[...]
    dec_ref[...] = dec.reshape(T, Bb, Sp)

    # Final hidden / cell state, written exactly once.
    hN_ref[...] = h_last
    cN_ref[...] = c_last


@jax.jit
def dkt_forward(x, h0, c0, W_ih, W_hh, b_ih, b_hh, W_dec, b_dec):
    """x: (B, T, I) batch_first (PyTorch). Returns (decoded (B*T, S), (h_n, c_n), output (B, T, H))."""
    B, T, I = x.shape
    H = h0.shape[-1]
    S = W_dec.shape[0]
    Hp = _round_up(H, _LANE)
    Sp = _round_up(S, _LANE)
    B_BLK = 8 if (B % 8 == 0 and B >= 8) else B
    n_bblk = B // B_BLK

    f32, bf16 = jnp.float32, jnp.bfloat16

    # ---- parameter packing: zero-pad to lane-dense shapes (one-time, outside the loop) ----
    wih_p = _pad_gate_rows(W_ih.astype(f32), H, Hp)                         # (4Hp, I)
    whh_p = _pad_gate_rows(_pad_axis(W_hh.astype(f32), 1, Hp), H, Hp)       # (4Hp, Hp)
    b_p = _pad_gate_rows((b_ih + b_hh).astype(f32).reshape(4 * H, 1),
                         H, Hp).reshape(1, 4 * Hp)                          # (1, 4Hp)
    wdec_p = _pad_axis(_pad_axis(W_dec.astype(f32), 0, Sp), 1, Hp)          # (Sp, Hp)
    bdec_p = _pad_axis(b_dec.astype(f32), 0, Sp).reshape(1, Sp)             # (1, Sp)

    # bf16 MXU operands (halves weight/x DMA bytes); state & elementwise math stay f32.
    x_tm = jnp.transpose(x, (1, 0, 2)).astype(bf16)      # (T, B, I) time-major
    wih_t = wih_p.T.astype(bf16)                         # (I, 4Hp)
    whh_t = whh_p.T.astype(bf16)                         # (Hp, 4Hp)
    wdec_t = wdec_p.T.astype(bf16)                       # (Hp, Sp)
    h0_p = _pad_axis(h0.astype(f32), 1, Hp)              # (B, Hp)
    c0_p = _pad_axis(c0.astype(f32), 1, Hp)              # (B, Hp)

    out_shapes = (
        jax.ShapeDtypeStruct((T, B, Hp), f32),   # hidden sequence (time-major)
        jax.ShapeDtypeStruct((T, B, Sp), f32),   # decoded (time-major)
        jax.ShapeDtypeStruct((B, Hp), f32),      # h_n
        jax.ShapeDtypeStruct((B, Hp), f32),      # c_n
    )

    in_specs = [
        pl.BlockSpec((T, B_BLK, I), lambda b: (0, b, 0)),      # x (time-major)
        pl.BlockSpec((I, 4 * Hp), lambda b: (0, 0)),           # W_ih^T
        pl.BlockSpec((Hp, 4 * Hp), lambda b: (0, 0)),          # W_hh^T
        pl.BlockSpec((1, 4 * Hp), lambda b: (0, 0)),           # b_ih + b_hh
        pl.BlockSpec((B_BLK, Hp), lambda b: (b, 0)),           # h0
        pl.BlockSpec((B_BLK, Hp), lambda b: (b, 0)),           # c0
        pl.BlockSpec((Hp, Sp), lambda b: (0, 0)),              # W_dec^T
        pl.BlockSpec((1, Sp), lambda b: (0, 0)),               # b_dec
    ]
    out_specs = [
        pl.BlockSpec((T, B_BLK, Hp), lambda b: (0, b, 0)),
        pl.BlockSpec((T, B_BLK, Sp), lambda b: (0, b, 0)),
        pl.BlockSpec((B_BLK, Hp), lambda b: (b, 0)),
        pl.BlockSpec((B_BLK, Hp), lambda b: (b, 0)),
    ]

    hseq_tm, dec_tm, h_n_p, c_n_p = pl.pallas_call(
        _dkt_kernel,
        out_shape=out_shapes,
        grid_spec=pltpu.PrefetchScalarGridSpec(
            num_scalar_prefetch=0,
            grid=(n_bblk,),                       # batch-parallel axis (2 TCs on v7x)
            in_specs=in_specs,
            out_specs=out_specs,
            scratch_shapes=[
                pltpu.VMEM((T, B_BLK, 4 * Hp), f32),   # precomputed gate inputs
            ],
        ),
        compiler_params=pltpu.CompilerParams(
            dimension_semantics=("parallel",),
            vmem_limit_bytes=32 * 1024 * 1024,
        ),
    )(x_tm, wih_t, whh_t, b_p, h0_p, c0_p, wdec_t, bdec_p)

    # Slice away lane padding; match PyTorch ordering:
    # decoded = decoder(output.view(B*T, H)) with output (B, T, H).
    seq_out = jnp.transpose(hseq_tm[:, :, :H], (1, 0, 2))                    # (B, T, H)
    decoded = jnp.transpose(dec_tm[:, :, :S], (1, 0, 2)).reshape(B * T, S)   # (B*T, S)
    hidden = (h_n_p[None, :, :H], c_n_p[None, :, :H])                        # (1, B, H)
    return decoded, hidden, seq_out


def _reference_forward(x, h0, c0, W_ih, W_hh, b_ih, b_hh, W_dec, b_dec):
    B, T, I = x.shape
    H = h0.shape[-1]

    def step(carry, x_t):
        h, c = carry
        gates = x_t @ W_ih.T + b_ih + h @ W_hh.T + b_hh
        i_g = jax.nn.sigmoid(gates[:, :H])
        f_g = jax.nn.sigmoid(gates[:, H:2 * H])
        g_g = jnp.tanh(gates[:, 2 * H:3 * H])
        o_g = jax.nn.sigmoid(gates[:, 3 * H:])
        c_new = f_g * c + i_g * g_g
        h_new = o_g * jnp.tanh(c_new)
        return (h_new, c_new), h_new

    (hN, cN), hs = lax.scan(step, (h0, c0), jnp.transpose(x, (1, 0, 2)))
    out = jnp.transpose(hs, (1, 0, 2))
    decoded = out.reshape(B * T, H) @ W_dec.T + b_dec
    return decoded, (hN[None], cN[None])


if __name__ == "__main__":
    # Small shapes consistent with the module: batch=16 (>=2 batch blocks for the
    # parallel grid axis), seq=8, input=32, hidden=32, num_skills=32, nlayers=1.
    B, T, I, H, S = 16, 8, 32, 32, 32

    key = jax.random.PRNGKey(0)
    ks = jax.random.split(key, 8)
    bound = 1.0 / jnp.sqrt(H)
    x = jax.random.normal(ks[0], (B, T, I), jnp.float32)
    W_ih = jax.random.uniform(ks[1], (4 * H, I), jnp.float32, -bound, bound)
    W_hh = jax.random.uniform(ks[2], (4 * H, H), jnp.float32, -bound, bound)
    b_ih = jax.random.uniform(ks[3], (4 * H,), jnp.float32, -bound, bound)
    b_hh = jax.random.uniform(ks[4], (4 * H,), jnp.float32, -bound, bound)
    # decoder init per init_weights(): weight ~ U(-0.05, 0.05), bias = 0
    W_dec = jax.random.uniform(ks[5], (S, H), jnp.float32, -0.05, 0.05)
    b_dec = jnp.zeros((S,), jnp.float32)
    # init_hidden(): zeros
    h0 = jnp.zeros((B, H), jnp.float32)
    c0 = jnp.zeros((B, H), jnp.float32)

    decoded, (h_n, c_n), _ = dkt_forward(x, h0, c0, W_ih, W_hh, b_ih, b_hh, W_dec, b_dec)
    jax.block_until_ready((decoded, h_n, c_n))

    ref_dec, (ref_h, ref_c) = _reference_forward(x, h0, c0, W_ih, W_hh, b_ih, b_hh, W_dec, b_dec)
    assert decoded.shape == (B * T, S)
    assert h_n.shape == (1, B, H) and c_n.shape == (1, B, H)
    # Tolerance loosened vs f32 reference because MXU operands are bf16
    # (state / elementwise math stays f32 to bound drift over T steps).
    assert jnp.allclose(decoded, ref_dec, atol=5e-2, rtol=5e-2)
    assert jnp.allclose(h_n, ref_h, atol=5e-2, rtol=5e-2)
    assert jnp.allclose(c_n, ref_c, atol=5e-2, rtol=5e-2)

    print("KERNEL_OK")
</pallas_src>

<mosaic_0001>
module attributes {stable_mosaic.version = 11 : i64} {
  func.func @_dkt_kernel(%arg0: i32, %arg1: memref<8x8x32xbf16, #tpu.memory_space<vmem>>, %arg2: memref<32x512xbf16, #tpu.memory_space<vmem>>, %arg3: memref<128x512xbf16, #tpu.memory_space<vmem>>, %arg4: memref<1x512xf32, #tpu.memory_space<vmem>>, %arg5: memref<8x128xf32, #tpu.memory_space<vmem>>, %arg6: memref<8x128xf32, #tpu.memory_space<vmem>>, %arg7: memref<128x128xbf16, #tpu.memory_space<vmem>>, %arg8: memref<1x128xf32, #tpu.memory_space<vmem>>, %arg9: memref<8x8x128xf32, #tpu.memory_space<vmem>>, %arg10: memref<8x8x128xf32, #tpu.memory_space<vmem>>, %arg11: memref<8x128xf32, #tpu.memory_space<vmem>>, %arg12: memref<8x128xf32, #tpu.memory_space<vmem>>, %arg13: memref<8x8x512xf32, #tpu.memory_space<vmem>>) attributes {dimension_semantics = [#tpu.dimension_semantics<parallel>], iteration_bounds = array<i64: 2>, scalar_prefetch = 0 : i64, scratch_operands = 1 : i64, tpu.core_type = #tpu.core_type<tc>, window_params = [{transform_indices = @transform_0, window_bounds = array<i64: 8, 8, 32>}, {pipeline_mode = #tpu.pipeline_mode<synchronous>, transform_indices = @transform_1, window_bounds = array<i64: 32, 512>}, {pipeline_mode = #tpu.pipeline_mode<synchronous>, transform_indices = @transform_2, window_bounds = array<i64: 128, 512>}, {pipeline_mode = #tpu.pipeline_mode<synchronous>, transform_indices = @transform_3, window_bounds = array<i64: 1, 512>}, {transform_indices = @transform_4, window_bounds = array<i64: 8, 128>}, {transform_indices = @transform_5, window_bounds = array<i64: 8, 128>}, {pipeline_mode = #tpu.pipeline_mode<synchronous>, transform_indices = @transform_6, window_bounds = array<i64: 128, 128>}, {pipeline_mode = #tpu.pipeline_mode<synchronous>, transform_indices = @transform_7, window_bounds = array<i64: 1, 128>}, {transform_indices = @transform_8, window_bounds = array<i64: 8, 8, 128>}, {transform_indices = @transform_9, window_bounds = array<i64: 8, 8, 128>}, {transform_indices = @transform_10, window_bounds = array<i64: 8, 128>}, {transform_indices = @transform_11, window_bounds = array<i64: 8, 128>}]} {
    %c0 = arith.constant 0 : index
    %c0_0 = arith.constant 0 : index
    %c0_1 = arith.constant 0 : index
    %0 = vector.load %arg1[%c0, %c0_0, %c0_1] : memref<8x8x32xbf16, #tpu.memory_space<vmem>>, vector<8x8x32xbf16>
    %1 = vector.shape_cast %0 : vector<8x8x32xbf16> to vector<64x32xbf16>
    %c0_2 = arith.constant 0 : index
    %c0_3 = arith.constant 0 : index
    %2 = vector.load %arg2[%c0_2, %c0_3] : memref<32x512xbf16, #tpu.memory_space<vmem>>, vector<32x512xbf16>
    %cst = arith.constant dense<0.000000e+00> : vector<64x512xf32>
    %3 = tpu.matmul %1, %2, %cst {dimension_numbers = #tpu.dot_dimension_numbers<[1], [0], [0], [1], [0, 0, 1, 1], [], []>} : vector<64x32xbf16>, vector<32x512xbf16>, vector<64x512xf32> -> vector<64x512xf32>
    %c0_4 = arith.constant 0 : index
    %c0_5 = arith.constant 0 : index
    %4 = vector.load %arg4[%c0_4, %c0_5] : memref<1x512xf32, #tpu.memory_space<vmem>>, vector<1x512xf32>
    %5 = vector.broadcast %4 : vector<1x512xf32> to vector<64x512xf32>
    %6 = arith.addf %3, %5 : vector<64x512xf32>
    %7 = vector.shape_cast %6 : vector<64x512xf32> to vector<8x8x512xf32>
    %c0_6 = arith.constant 0 : index
    %c0_7 = arith.constant 0 : index
    %c0_8 = arith.constant 0 : index
    %8 = vector.load %arg13[%c0_6, %c0_7, %c0_8] : memref<8x8x512xf32, #tpu.memory_space<vmem>>, vector<8x8x512xf32>
    tpu.vector_store %arg13[%c0_6, %c0_7, %c0_8], %7 {strides = array<i32>} : memref<8x8x512xf32, #tpu.memory_space<vmem>>, vector<8x8x512xf32>,
    %c0_9 = arith.constant 0 : index
    %c0_10 = arith.constant 0 : index
    %9 = vector.load %arg3[%c0_9, %c0_10] : memref<128x512xbf16, #tpu.memory_space<vmem>>, vector<128x512xbf16>
    %c0_11 = arith.constant 0 : index
    %c0_12 = arith.constant 0 : index
    %10 = vector.load %arg5[%c0_11, %c0_12] : memref<8x128xf32, #tpu.memory_space<vmem>>, vector<8x128xf32>
    %c0_13 = arith.constant 0 : index
    %c0_14 = arith.constant 0 : index
    %11 = vector.load %arg6[%c0_13, %c0_14] : memref<8x128xf32, #tpu.memory_space<vmem>>, vector<8x128xf32>
    %c0_i32 = arith.constant 0 : i32
    %12 = arith.index_cast %c0_i32 : i32 to index
    %c0_15 = arith.constant 0 : index
    %c0_16 = arith.constant 0 : index
    %13 = vector.load %arg13[%12, %c0_15, %c0_16] : memref<8x8x512xf32, #tpu.memory_space<vmem>>, vector<1x8x512xf32>
    %14 = vector.shape_cast %13 : vector<1x8x512xf32> to vector<8x512xf32>
    %15 = arith.truncf %10 : vector<8x128xf32> to vector<8x128xbf16>
    %cst_17 = arith.constant dense<0.000000e+00> : vector<8x512xf32>
    %16 = tpu.matmul %15, %9, %cst_17 {dimension_numbers = #tpu.dot_dimension_numbers<[1], [0], [0], [1], [0, 0, 1, 1], [], []>} : vector<8x128xbf16>, vector<128x512xbf16>, vector<8x512xf32> -> vector<8x512xf32>
    %17 = arith.addf %14, %16 : vector<8x512xf32>
    %18 = arith.negf %17 : vector<8x512xf32>
    %19 = math.exp %18 : vector<8x512xf32>
    %cst_18 = arith.constant 1.000000e+00 : f32
    %20 = vector.broadcast %cst_18 : f32 to vector<8x512xf32>
    %21 = arith.addf %20, %19 : vector<8x512xf32>
    %22 = arith.divf %20, %21 : vector<8x512xf32>
    %23 = vector.extract_strided_slice %22 {offsets = [0, 0], sizes = [8, 128], strides = [1, 1]} : vector<8x512xf32> to vector<8x128xf32>
    %24 = vector.extract_strided_slice %22 {offsets = [0, 128], sizes = [8, 128], strides = [1, 1]} : vector<8x512xf32> to vector<8x128xf32>
    %25 = vector.extract_strided_slice %22 {offsets = [0, 384], sizes = [8, 128], strides = [1, 1]} : vector<8x512xf32> to vector<8x128xf32>
    %26 = vector.extract_strided_slice %17 {offsets = [0, 256], sizes = [8, 128], strides = [1, 1]} : vector<8x512xf32> to vector<8x128xf32>
    %27 = math.tanh %26 : vector<8x128xf32>
    %28 = arith.mulf %24, %11 : vector<8x128xf32>
    %29 = arith.mulf %23, %27 : vector<8x128xf32>
    %30 = arith.addf %28, %29 : vector<8x128xf32>
    %31 = math.tanh %30 : vector<8x128xf32>
    %32 = arith.mulf %25, %31 : vector<8x128xf32>
    %33 = arith.index_cast %c0_i32 : i32 to index
    %c0_19 = arith.constant 0 : index
    %c0_20 = arith.constant 0 : index
    %34 = vector.load %arg9[%33, %c0_19, %c0_20] : memref<8x8x128xf32, #tpu.memory_space<vmem>>, vector<1x8x128xf32>
    %35 = vector.shape_cast %34 : vector<1x8x128xf32> to vector<8x128xf32>
    %36 = vector.shape_cast %32 : vector<8x128xf32> to vector<1x8x128xf32>
    tpu.vector_store %arg9[%33, %c0_19, %c0_20], %36 {strides = array<i32>} : memref<8x8x128xf32, #tpu.memory_space<vmem>>, vector<1x8x128xf32>,
    %c1_i32 = arith.constant 1 : i32
    %37 = arith.index_cast %c1_i32 : i32 to index
    %c0_21 = arith.constant 0 : index
    %c0_22 = arith.constant 0 : index
    %38 = vector.load %arg13[%37, %c0_21, %c0_22] : memref<8x8x512xf32, #tpu.memory_space<vmem>>, vector<1x8x512xf32>
    %39 = vector.shape_cast %38 : vector<1x8x512xf32> to vector<8x512xf32>
    %40 = arith.truncf %32 : vector<8x128xf32> to vector<8x128xbf16>
    %cst_23 = arith.constant dense<0.000000e+00> : vector<8x512xf32>
    %41 = tpu.matmul %40, %9, %cst_23 {dimension_numbers = #tpu.dot_dimension_numbers<[1], [0], [0], [1], [0, 0, 1, 1], [], []>} : vector<8x128xbf16>, vector<128x512xbf16>, vector<8x512xf32> -> vector<8x512xf32>
    %42 = arith.addf %39, %41 : vector<8x512xf32>
    %43 = arith.negf %42 : vector<8x512xf32>
    %44 = math.exp %43 : vector<8x512xf32>
    %cst_24 = arith.constant 1.000000e+00 : f32
    %45 = vector.broadcast %cst_24 : f32 to vector<8x512xf32>
    %46 = arith.addf %45, %44 : vector<8x512xf32>
    %47 = arith.divf %45, %46 : vector<8x512xf32>
    %48 = vector.extract_strided_slice %47 {offsets = [0, 0], sizes = [8, 128], strides = [1, 1]} : vector<8x512xf32> to vector<8x128xf32>
    %49 = vector.extract_strided_slice %47 {offsets = [0, 128], sizes = [8, 128], strides = [1, 1]} : vector<8x512xf32> to vector<8x128xf32>
    %50 = vector.extract_strided_slice %47 {offsets = [0, 384], sizes = [8, 128], strides = [1, 1]} : vector<8x512xf32> to vector<8x128xf32>
    %51 = vector.extract_strided_slice %42 {offsets = [0, 256], sizes = [8, 128], strides = [1, 1]} : vector<8x512xf32> to vector<8x128xf32>
    %52 = math.tanh %51 : vector<8x128xf32>
    %53 = arith.mulf %49, %30 : vector<8x128xf32>
    %54 = arith.mulf %48, %52 : vector<8x128xf32>
    %55 = arith.addf %53, %54 : vector<8x128xf32>
    %56 = math.tanh %55 : vector<8x128xf32>
    %57 = arith.mulf %50, %56 : vector<8x128xf32>
    %58 = arith.index_cast %c1_i32 : i32 to index
    %c0_25 = arith.constant 0 : index
    %c0_26 = arith.constant 0 : index
    %59 = vector.load %arg9[%58, %c0_25, %c0_26] : memref<8x8x128xf32, #tpu.memory_space<vmem>>, vector<1x8x128xf32>
    %60 = vector.shape_cast %59 : vector<1x8x128xf32> to vector<8x128xf32>
    %61 = vector.shape_cast %57 : vector<8x128xf32> to vector<1x8x128xf32>
    tpu.vector_store %arg9[%58, %c0_25, %c0_26], %61 {strides = array<i32>} : memref<8x8x128xf32, #tpu.memory_space<vmem>>, vector<1x8x128xf32>,
    %c2_i32 = arith.constant 2 : i32
    %62 = arith.index_cast %c2_i32 : i32 to index
    %c0_27 = arith.constant 0 : index
    %c0_28 = arith.constant 0 : index
    %63 = vector.load %arg13[%62, %c0_27, %c0_28] : memref<8x8x512xf32, #tpu.memory_space<vmem>>, vector<1x8x512xf32>
    %64 = vector.shape_cast %63 : vector<1x8x512xf32> to vector<8x512xf32>
    %65 = arith.truncf %57 : vector<8x128xf32> to vector<8x128xbf16>
    %cst_29 = arith.constant dense<0.000000e+00> : vector<8x512xf32>
    %66 = tpu.matmul %65, %9, %cst_29 {dimension_numbers = #tpu.dot_dimension_numbers<[1], [0], [0], [1], [0, 0, 1, 1], [], []>} : vector<8x128xbf16>, vector<128x512xbf16>, vector<8x512xf32> -> vector<8x512xf32>
    %67 = arith.addf %64, %66 : vector<8x512xf32>
    %68 = arith.negf %67 : vector<8x512xf32>
    %69 = math.exp %68 : vector<8x512xf32>
    %cst_30 = arith.constant 1.000000e+00 : f32
    %70 = vector.broadcast %cst_30 : f32 to vector<8x512xf32>
    %71 = arith.addf %70, %69 : vector<8x512xf32>
    %72 = arith.divf %70, %71 : vector<8x512xf32>
    %73 = vector.extract_strided_slice %72 {offsets = [0, 0], sizes = [8, 128], strides = [1, 1]} : vector<8x512xf32> to vector<8x128xf32>
    %74 = vector.extract_strided_slice %72 {offsets = [0, 128], sizes = [8, 128], strides = [1, 1]} : vector<8x512xf32> to vector<8x128xf32>
    %75 = vector.extract_strided_slice %72 {offsets = [0, 384], sizes = [8, 128], strides = [1, 1]} : vector<8x512xf32> to vector<8x128xf32>
    %76 = vector.extract_strided_slice %67 {offsets = [0, 256], sizes = [8, 128], strides = [1, 1]} : vector<8x512xf32> to vector<8x128xf32>
    %77 = math.tanh %76 : vector<8x128xf32>
    %78 = arith.mulf %74, %55 : vector<8x128xf32>
    %79 = arith.mulf %73, %77 : vector<8x128xf32>
    %80 = arith.addf %78, %79 : vector<8x128xf32>
    %81 = math.tanh %80 : vector<8x128xf32>
    %82 = arith.mulf %75, %81 : vector<8x128xf32>
    %83 = arith.index_cast %c2_i32 : i32 to index
    %c0_31 = arith.constant 0 : index
    %c0_32 = arith.constant 0 : index
    %84 = vector.load %arg9[%83, %c0_31, %c0_32] : memref<8x8x128xf32, #tpu.memory_space<vmem>>, vector<1x8x128xf32>
    %85 = vector.shape_cast %84 : vector<1x8x128xf32> to vector<8x128xf32>
    %86 = vector.shape_cast %82 : vector<8x128xf32> to vector<1x8x128xf32>
    tpu.vector_store %arg9[%83, %c0_31, %c0_32], %86 {strides = array<i32>} : memref<8x8x128xf32, #tpu.memory_space<vmem>>, vector<1x8x128xf32>,
    %c3_i32 = arith.constant 3 : i32
    %87 = arith.index_cast %c3_i32 : i32 to index
    %c0_33 = arith.constant 0 : index
    %c0_34 = arith.constant 0 : index
    %88 = vector.load %arg13[%87, %c0_33, %c0_34] : memref<8x8x512xf32, #tpu.memory_space<vmem>>, vector<1x8x512xf32>
    %89 = vector.shape_cast %88 : vector<1x8x512xf32> to vector<8x512xf32>
    %90 = arith.truncf %82 : vector<8x128xf32> to vector<8x128xbf16>
    %cst_35 = arith.constant dense<0.000000e+00> : vector<8x512xf32>
    %91 = tpu.matmul %90, %9, %cst_35 {dimension_numbers = #tpu.dot_dimension_numbers<[1], [0], [0], [1], [0, 0, 1, 1], [], []>} : vector<8x128xbf16>, vector<128x512xbf16>, vector<8x512xf32> -> vector<8x512xf32>
    %92 = arith.addf %89, %91 : vector<8x512xf32>
    %93 = arith.negf %92 : vector<8x512xf32>
    %94 = math.exp %93 : vector<8x512xf32>
    %cst_36 = arith.constant 1.000000e+00 : f32
    %95 = vector.broadcast %cst_36 : f32 to vector<8x512xf32>
    %96 = arith.addf %95, %94 : vector<8x512xf32>
    %97 = arith.divf %95, %96 : vector<8x512xf32>
    %98 = vector.extract_strided_slice %97 {offsets = [0, 0], sizes = [8, 128], strides = [1, 1]} : vector<8x512xf32> to vector<8x128xf32>
    %99 = vector.extract_strided_slice %97 {offsets = [0, 128], sizes = [8, 128], strides = [1, 1]} : vector<8x512xf32> to vector<8x128xf32>
    %100 = vector.extract_strided_slice %97 {offsets = [0, 384], sizes = [8, 128], strides = [1, 1]} : vector<8x512xf32> to vector<8x128xf32>
    %101 = vector.extract_strided_slice %92 {offsets = [0, 256], sizes = [8, 128], strides = [1, 1]} : vector<8x512xf32> to vector<8x128xf32>
    %102 = math.tanh %101 : vector<8x128xf32>
    %103 = arith.mulf %99, %80 : vector<8x128xf32>
    %104 = arith.mulf %98, %102 : vector<8x128xf32>
    %105 = arith.addf %103, %104 : vector<8x128xf32>
    %106 = math.tanh %105 : vector<8x128xf32>
    %107 = arith.mulf %100, %106 : vector<8x128xf32>
    %108 = arith.index_cast %c3_i32 : i32 to index
    %c0_37 = arith.constant 0 : index
    %c0_38 = arith.constant 0 : index
    %109 = vector.load %arg9[%108, %c0_37, %c0_38] : memref<8x8x128xf32, #tpu.memory_space<vmem>>, vector<1x8x128xf32>
    %110 = vector.shape_cast %109 : vector<1x8x128xf32> to vector<8x128xf32>
    %111 = vector.shape_cast %107 : vector<8x128xf32> to vector<1x8x128xf32>
    tpu.vector_store %arg9[%108, %c0_37, %c0_38], %111 {strides = array<i32>} : memref<8x8x128xf32, #tpu.memory_space<vmem>>, vector<1x8x128xf32>,
    %c4_i32 = arith.constant 4 : i32
    %112 = arith.index_cast %c4_i32 : i32 to index
    %c0_39 = arith.constant 0 : index
    %c0_40 = arith.constant 0 : index
    %113 = vector.load %arg13[%112, %c0_39, %c0_40] : memref<8x8x512xf32, #tpu.memory_space<vmem>>, vector<1x8x512xf32>
    %114 = vector.shape_cast %113 : vector<1x8x512xf32> to vector<8x512xf32>
    %115 = arith.truncf %107 : vector<8x128xf32> to vector<8x128xbf16>
    %cst_41 = arith.constant dense<0.000000e+00> : vector<8x512xf32>
    %116 = tpu.matmul %115, %9, %cst_41 {dimension_numbers = #tpu.dot_dimension_numbers<[1], [0], [0], [1], [0, 0, 1, 1], [], []>} : vector<8x128xbf16>, vector<128x512xbf16>, vector<8x512xf32> -> vector<8x512xf32>
    %117 = arith.addf %114, %116 : vector<8x512xf32>
    %118 = arith.negf %117 : vector<8x512xf32>
    %119 = math.exp %118 : vector<8x512xf32>
    %cst_42 = arith.constant 1.000000e+00 : f32
    %120 = vector.broadcast %cst_42 : f32 to vector<8x512xf32>
    %121 = arith.addf %120, %119 : vector<8x512xf32>
    %122 = arith.divf %120, %121 : vector<8x512xf32>
    %123 = vector.extract_strided_slice %122 {offsets = [0, 0], sizes = [8, 128], strides = [1, 1]} : vector<8x512xf32> to vector<8x128xf32>
    %124 = vector.extract_strided_slice %122 {offsets = [0, 128], sizes = [8, 128], strides = [1, 1]} : vector<8x512xf32> to vector<8x128xf32>
    %125 = vector.extract_strided_slice %122 {offsets = [0, 384], sizes = [8, 128], strides = [1, 1]} : vector<8x512xf32> to vector<8x128xf32>
    %126 = vector.extract_strided_slice %117 {offsets = [0, 256], sizes = [8, 128], strides = [1, 1]} : vector<8x512xf32> to vector<8x128xf32>
    %127 = math.tanh %126 : vector<8x128xf32>
    %128 = arith.mulf %124, %105 : vector<8x128xf32>
    %129 = arith.mulf %123, %127 : vector<8x128xf32>
    %130 = arith.addf %128, %129 : vector<8x128xf32>
    %131 = math.tanh %130 : vector<8x128xf32>
    %132 = arith.mulf %125, %131 : vector<8x128xf32>
    %133 = arith.index_cast %c4_i32 : i32 to index
    %c0_43 = arith.constant 0 : index
    %c0_44 = arith.constant 0 : index
    %134 = vector.load %arg9[%133, %c0_43, %c0_44] : memref<8x8x128xf32, #tpu.memory_space<vmem>>, vector<1x8x128xf32>
    %135 = vector.shape_cast %134 : vector<1x8x128xf32> to vector<8x128xf32>
    %136 = vector.shape_cast %132 : vector<8x128xf32> to vector<1x8x128xf32>
    tpu.vector_store %arg9[%133, %c0_43, %c0_44], %136 {strides = array<i32>} : memref<8x8x128xf32, #tpu.memory_space<vmem>>, vector<1x8x128xf32>,
    %c5_i32 = arith.constant 5 : i32
    %137 = arith.index_cast %c5_i32 : i32 to index
    %c0_45 = arith.constant 0 : index
    %c0_46 = arith.constant 0 : index
    %138 = vector.load %arg13[%137, %c0_45, %c0_46] : memref<8x8x512xf32, #tpu.memory_space<vmem>>, vector<1x8x512xf32>
    %139 = vector.shape_cast %138 : vector<1x8x512xf32> to vector<8x512xf32>
    %140 = arith.truncf %132 : vector<8x128xf32> to vector<8x128xbf16>
    %cst_47 = arith.constant dense<0.000000e+00> : vector<8x512xf32>
    %141 = tpu.matmul %140, %9, %cst_47 {dimension_numbers = #tpu.dot_dimension_numbers<[1], [0], [0], [1], [0, 0, 1, 1], [], []>} : vector<8x128xbf16>, vector<128x512xbf16>, vector<8x512xf32> -> vector<8x512xf32>
    %142 = arith.addf %139, %141 : vector<8x512xf32>
    %143 = arith.negf %142 : vector<8x512xf32>
    %144 = math.exp %143 : vector<8x512xf32>
    %cst_48 = arith.constant 1.000000e+00 : f32
    %145 = vector.broadcast %cst_48 : f32 to vector<8x512xf32>
    %146 = arith.addf %145, %144 : vector<8x512xf32>
    %147 = arith.divf %145, %146 : vector<8x512xf32>
    %148 = vector.extract_strided_slice %147 {offsets = [0, 0], sizes = [8, 128], strides = [1, 1]} : vector<8x512xf32> to vector<8x128xf32>
    %149 = vector.extract_strided_slice %147 {offsets = [0, 128], sizes = [8, 128], strides = [1, 1]} : vector<8x512xf32> to vector<8x128xf32>
    %150 = vector.extract_strided_slice %147 {offsets = [0, 384], sizes = [8, 128], strides = [1, 1]} : vector<8x512xf32> to vector<8x128xf32>
    %151 = vector.extract_strided_slice %142 {offsets = [0, 256], sizes = [8, 128], strides = [1, 1]} : vector<8x512xf32> to vector<8x128xf32>
    %152 = math.tanh %151 : vector<8x128xf32>
    %153 = arith.mulf %149, %130 : vector<8x128xf32>
    %154 = arith.mulf %148, %152 : vector<8x128xf32>
    %155 = arith.addf %153, %154 : vector<8x128xf32>
    %156 = math.tanh %155 : vector<8x128xf32>
    %157 = arith.mulf %150, %156 : vector<8x128xf32>
    %158 = arith.index_cast %c5_i32 : i32 to index
    %c0_49 = arith.constant 0 : index
    %c0_50 = arith.constant 0 : index
    %159 = vector.load %arg9[%158, %c0_49, %c0_50] : memref<8x8x128xf32, #tpu.memory_space<vmem>>, vector<1x8x128xf32>
    %160 = vector.shape_cast %159 : vector<1x8x128xf32> to vector<8x128xf32>
    %161 = vector.shape_cast %157 : vector<8x128xf32> to vector<1x8x128xf32>
    tpu.vector_store %arg9[%158, %c0_49, %c0_50], %161 {strides = array<i32>} : memref<8x8x128xf32, #tpu.memory_space<vmem>>, vector<1x8x128xf32>,
    %c6_i32 = arith.constant 6 : i32
    %162 = arith.index_cast %c6_i32 : i32 to index
    %c0_51 = arith.constant 0 : index
    %c0_52 = arith.constant 0 : index
    %163 = vector.load %arg13[%162, %c0_51, %c0_52] : memref<8x8x512xf32, #tpu.memory_space<vmem>>, vector<1x8x512xf32>
    %164 = vector.shape_cast %163 : vector<1x8x512xf32> to vector<8x512xf32>
    %165 = arith.truncf %157 : vector<8x128xf32> to vector<8x128xbf16>
    %cst_53 = arith.constant dense<0.000000e+00> : vector<8x512xf32>
    %166 = tpu.matmul %165, %9, %cst_53 {dimension_numbers = #tpu.dot_dimension_numbers<[1], [0], [0], [1], [0, 0, 1, 1], [], []>} : vector<8x128xbf16>, vector<128x512xbf16>, vector<8x512xf32> -> vector<8x512xf32>
    %167 = arith.addf %164, %166 : vector<8x512xf32>
    %168 = arith.negf %167 : vector<8x512xf32>
    %169 = math.exp %168 : vector<8x512xf32>
    %cst_54 = arith.constant 1.000000e+00 : f32
    %170 = vector.broadcast %cst_54 : f32 to vector<8x512xf32>
    %171 = arith.addf %170, %169 : vector<8x512xf32>
    %172 = arith.divf %170, %171 : vector<8x512xf32>
    %173 = vector.extract_strided_slice %172 {offsets = [0, 0], sizes = [8, 128], strides = [1, 1]} : vector<8x512xf32> to vector<8x128xf32>
    %174 = vector.extract_strided_slice %172 {offsets = [0, 128], sizes = [8, 128], strides = [1, 1]} : vector<8x512xf32> to vector<8x128xf32>
    %175 = vector.extract_strided_slice %172 {offsets = [0, 384], sizes = [8, 128], strides = [1, 1]} : vector<8x512xf32> to vector<8x128xf32>
    %176 = vector.extract_strided_slice %167 {offsets = [0, 256], sizes = [8, 128], strides = [1, 1]} : vector<8x512xf32> to vector<8x128xf32>
    %177 = math.tanh %176 : vector<8x128xf32>
    %178 = arith.mulf %174, %155 : vector<8x128xf32>
    %179 = arith.mulf %173, %177 : vector<8x128xf32>
    %180 = arith.addf %178, %179 : vector<8x128xf32>
    %181 = math.tanh %180 : vector<8x128xf32>
    %182 = arith.mulf %175, %181 : vector<8x128xf32>
    %183 = arith.index_cast %c6_i32 : i32 to index
    %c0_55 = arith.constant 0 : index
    %c0_56 = arith.constant 0 : index
    %184 = vector.load %arg9[%183, %c0_55, %c0_56] : memref<8x8x128xf32, #tpu.memory_space<vmem>>, vector<1x8x128xf32>
    %185 = vector.shape_cast %184 : vector<1x8x128xf32> to vector<8x128xf32>
    %186 = vector.shape_cast %182 : vector<8x128xf32> to vector<1x8x128xf32>
    tpu.vector_store %arg9[%183, %c0_55, %c0_56], %186 {strides = array<i32>} : memref<8x8x128xf32, #tpu.memory_space<vmem>>, vector<1x8x128xf32>,
    %c7_i32 = arith.constant 7 : i32
    %187 = arith.index_cast %c7_i32 : i32 to index
    %c0_57 = arith.constant 0 : index
    %c0_58 = arith.constant 0 : index
    %188 = vector.load %arg13[%187, %c0_57, %c0_58] : memref<8x8x512xf32, #tpu.memory_space<vmem>>, vector<1x8x512xf32>
    %189 = vector.shape_cast %188 : vector<1x8x512xf32> to vector<8x512xf32>
    %190 = arith.truncf %182 : vector<8x128xf32> to vector<8x128xbf16>
    %cst_59 = arith.constant dense<0.000000e+00> : vector<8x512xf32>
    %191 = tpu.matmul %190, %9, %cst_59 {dimension_numbers = #tpu.dot_dimension_numbers<[1], [0], [0], [1], [0, 0, 1, 1], [], []>} : vector<8x128xbf16>, vector<128x512xbf16>, vector<8x512xf32> -> vector<8x512xf32>
    %192 = arith.addf %189, %191 : vector<8x512xf32>
    %193 = arith.negf %192 : vector<8x512xf32>
    %194 = math.exp %193 : vector<8x512xf32>
    %cst_60 = arith.constant 1.000000e+00 : f32
    %195 = vector.broadcast %cst_60 : f32 to vector<8x512xf32>
    %196 = arith.addf %195, %194 : vector<8x512xf32>
    %197 = arith.divf %195, %196 : vector<8x512xf32>
    %198 = vector.extract_strided_slice %197 {offsets = [0, 0], sizes = [8, 128], strides = [1, 1]} : vector<8x512xf32> to vector<8x128xf32>
    %199 = vector.extract_strided_slice %197 {offsets = [0, 128], sizes = [8, 128], strides = [1, 1]} : vector<8x512xf32> to vector<8x128xf32>
    %200 = vector.extract_strided_slice %197 {offsets = [0, 384], sizes = [8, 128], strides = [1, 1]} : vector<8x512xf32> to vector<8x128xf32>
    %201 = vector.extract_strided_slice %192 {offsets = [0, 256], sizes = [8, 128], strides = [1, 1]} : vector<8x512xf32> to vector<8x128xf32>
    %202 = math.tanh %201 : vector<8x128xf32>
    %203 = arith.mulf %199, %180 : vector<8x128xf32>
    %204 = arith.mulf %198, %202 : vector<8x128xf32>
    %205 = arith.addf %203, %204 : vector<8x128xf32>
    %206 = math.tanh %205 : vector<8x128xf32>
    %207 = arith.mulf %200, %206 : vector<8x128xf32>
    %208 = arith.index_cast %c7_i32 : i32 to index
    %c0_61 = arith.constant 0 : index
    %c0_62 = arith.constant 0 : index
    %209 = vector.load %arg9[%208, %c0_61, %c0_62] : memref<8x8x128xf32, #tpu.memory_space<vmem>>, vector<1x8x128xf32>
    %210 = vector.shape_cast %209 : vector<1x8x128xf32> to vector<8x128xf32>
    %211 = vector.shape_cast %207 : vector<8x128xf32> to vector<1x8x128xf32>
    tpu.vector_store %arg9[%208, %c0_61, %c0_62], %211 {strides = array<i32>} : memref<8x8x128xf32, #tpu.memory_space<vmem>>, vector<1x8x128xf32>,
    %c8_i32 = arith.constant 8 : i32
    %c0_63 = arith.constant 0 : index
    %c0_64 = arith.constant 0 : index
    %c0_65 = arith.constant 0 : index
    %212 = vector.load %arg9[%c0_63, %c0_64, %c0_65] : memref<8x8x128xf32, #tpu.memory_space<vmem>>, vector<8x8x128xf32>
    %213 = vector.shape_cast %212 : vector<8x8x128xf32> to vector<64x128xf32>
    %214 = arith.truncf %213 : vector<64x128xf32> to vector<64x128xbf16>
    %c0_66 = arith.constant 0 : index
    %c0_67 = arith.constant 0 : index
    %215 = vector.load %arg7[%c0_66, %c0_67] : memref<128x128xbf16, #tpu.memory_space<vmem>>, vector<128x128xbf16>
    %cst_68 = arith.constant dense<0.000000e+00> : vector<64x128xf32>
    %216 = tpu.matmul %214, %215, %cst_68 {dimension_numbers = #tpu.dot_dimension_numbers<[1], [0], [0], [1], [0, 0, 1, 1], [], []>} : vector<64x128xbf16>, vector<128x128xbf16>, vector<64x128xf32> -> vector<64x128xf32>
    %c0_69 = arith.constant 0 : index
    %c0_70 = arith.constant 0 : index
    %217 = vector.load %arg8[%c0_69, %c0_70] : memref<1x128xf32, #tpu.memory_space<vmem>>, vector<1x128xf32>
    %218 = vector.broadcast %217 : vector<1x128xf32> to vector<64x128xf32>
    %219 = arith.addf %216, %218 : vector<64x128xf32>
    %220 = vector.shape_cast %219 : vector<64x128xf32> to vector<8x8x128xf32>
    %c0_71 = arith.constant 0 : index
    %c0_72 = arith.constant 0 : index
    %c0_73 = arith.constant 0 : index
    %221 = vector.load %arg10[%c0_71, %c0_72, %c0_73] : memref<8x8x128xf32, #tpu.memory_space<vmem>>, vector<8x8x128xf32>
    tpu.vector_store %arg10[%c0_71, %c0_72, %c0_73], %220 {strides = array<i32>} : memref<8x8x128xf32, #tpu.memory_space<vmem>>, vector<8x8x128xf32>,
    %c0_74 = arith.constant 0 : index
    %c0_75 = arith.constant 0 : index
    %222 = vector.load %arg11[%c0_74, %c0_75] : memref<8x128xf32, #tpu.memory_space<vmem>>, vector<8x128xf32>
    tpu.vector_store %arg11[%c0_74, %c0_75], %207 {strides = array<i32>} : memref<8x128xf32, #tpu.memory_space<vmem>>, vector<8x128xf32>,
    %c0_76 = arith.constant 0 : index
    %c0_77 = arith.constant 0 : index
    %223 = vector.load %arg12[%c0_76, %c0_77] : memref<8x128xf32, #tpu.memory_space<vmem>>, vector<8x128xf32>
    tpu.vector_store %arg12[%c0_76, %c0_77], %205 {strides = array<i32>} : memref<8x128xf32, #tpu.memory_space<vmem>>, vector<8x128xf32>,
    return
  }
  func.func @transform_0(%arg0: i32) -> (i32, i32, i32) {
    %c0_i32 = arith.constant 0 : i32
    %c0_i32_0 = arith.constant 0 : i32
    %c0_i32_1 = arith.constant 0 : i32
    return %c0_i32, %arg0, %c0_i32_0 : i32, i32, i32
  }
  func.func @transform_1(%arg0: i32) -> (i32, i32) {
    %c0_i32 = arith.constant 0 : i32
    %c0_i32_0 = arith.constant 0 : i32
    %c0_i32_1 = arith.constant 0 : i32
    return %c0_i32, %c0_i32_0 : i32, i32
  }
  func.func @transform_2(%arg0: i32) -> (i32, i32) {
    %c0_i32 = arith.constant 0 : i32
    %c0_i32_0 = arith.constant 0 : i32
    %c0_i32_1 = arith.constant 0 : i32
    return %c0_i32, %c0_i32_0 : i32, i32
  }
  func.func @transform_3(%arg0: i32) -> (i32, i32) {
    %c0_i32 = arith.constant 0 : i32
    %c0_i32_0 = arith.constant 0 : i32
    %c0_i32_1 = arith.constant 0 : i32
    return %c0_i32, %c0_i32_0 : i32, i32
  }
  func.func @transform_4(%arg0: i32) -> (i32, i32) {
    %c0_i32 = arith.constant 0 : i32
    %c0_i32_0 = arith.constant 0 : i32
    return %arg0, %c0_i32 : i32, i32
  }
  func.func @transform_5(%arg0: i32) -> (i32, i32) {
    %c0_i32 = arith.constant 0 : i32
    %c0_i32_0 = arith.constant 0 : i32
    return %arg0, %c0_i32 : i32, i32
  }
  func.func @transform_6(%arg0: i32) -> (i32, i32) {
    %c0_i32 = arith.constant 0 : i32
    %c0_i32_0 = arith.constant 0 : i32
    %c0_i32_1 = arith.constant 0 : i32
    return %c0_i32, %c0_i32_0 : i32, i32
  }
  func.func @transform_7(%arg0: i32) -> (i32, i32) {
    %c0_i32 = arith.constant 0 : i32
    %c0_i32_0 = arith.constant 0 : i32
    %c0_i32_1 = arith.constant 0 : i32
    return %c0_i32, %c0_i32_0 : i32, i32
  }
  func.func @transform_8(%arg0: i32) -> (i32, i32, i32) {
    %c0_i32 = arith.constant 0 : i32
    %c0_i32_0 = arith.constant 0 : i32
    %c0_i32_1 = arith.constant 0 : i32
    return %c0_i32, %arg0, %c0_i32_0 : i32, i32, i32
  }
  func.func @transform_9(%arg0: i32) -> (i32, i32, i32) {
    %c0_i32 = arith.constant 0 : i32
    %c0_i32_0 = arith.constant 0 : i32
    %c0_i32_1 = arith.constant 0 : i32
    return %c0_i32, %arg0, %c0_i32_0 : i32, i32, i32
  }
  func.func @transform_10(%arg0: i32) -> (i32, i32) {
    %c0_i32 = arith.constant 0 : i32
    %c0_i32_0 = arith.constant 0 : i32
    return %arg0, %c0_i32 : i32, i32
  }
  func.func @transform_11(%arg0: i32) -> (i32, i32) {
    %c0_i32 = arith.constant 0 : i32
    %c0_i32_0 = arith.constant 0 : i32
    return %arg0, %c0_i32 : i32, i32
  }
}

</mosaic_0001>

<llo_original>
// kernel: dkt_forward.1
$region0: #{dkt_forward.1}
  #allocation0 [shape = 'u32[]', space=smem, size = 0x4, offset = 0x4, fixed_abs, tag = 'smem constant byte address 0x4 - core index']
  #allocation1 [shape = 'u32[144,128]{1,0:T(1,128)}', space=vmem, size = 0x12000, scoped, tag = 'internal scratch']
  #allocation2 [shape = 'f32[8,8,512]{2,1,0:T(8,128)}', space=vmem, size = 0x20000, scoped, tag = 'scratch operand']
  %s0 = inlined_call_operand.vmem [shape: bf16[8,16,32], index: 0, kind: input, shape index: {}]
  %s1 = inlined_call_operand.vmem [shape: bf16[32,512], index: 1, kind: input, shape index: {}]
  %s2 = inlined_call_operand.vmem [shape: bf16[128,512], index: 2, kind: input, shape index: {}]
  %s3 = inlined_call_operand.vmem [shape: f32[1,512], index: 3, kind: input, shape index: {}]
  %s4 = inlined_call_operand.vmem [shape: f32[16,128], index: 4, kind: input, shape index: {}]
  %s5 = inlined_call_operand.vmem [shape: f32[16,128], index: 5, kind: input, shape index: {}]
  %s6 = inlined_call_operand.vmem [shape: bf16[128,128], index: 6, kind: input, shape index: {}]
  %s7 = inlined_call_operand.vmem [shape: f32[1,128], index: 7, kind: input, shape index: {}]
  %s8 = inlined_call_operand.vmem [shape: f32[8,16,128], index: 8, kind: output, shape index: {0}]
  %s9 = inlined_call_operand.vmem [shape: f32[8,16,128], index: 9, kind: output, shape index: {1}]
  %s10 = inlined_call_operand.vmem [shape: f32[16,128], index: 10, kind: output, shape index: {2}]
  %s11 = inlined_call_operand.vmem [shape: f32[16,128], index: 11, kind: output, shape index: {3}]
  %12 = xla_tuple %s8, %s9, %s10, %s11
  %s13 = sld [smem:[#allocation0]]
  $region198: #{dkt_forward.1} parent=0
    _
  %s15 = ssub.s32 1, %s13
  %s16 = scalar_select 0, %s15, %s13
  $region1: #{dkt_forward.1} parent=0
    #allocation3 [shape = 'u8[32768]{0}', space=vmem, size = 0x8000, scoped, tag = 'input window, operand 0']
    #allocation4 [shape = 'u8[65536]{0}', space=vmem, size = 0x10000, scoped, tag = 'output window, operand 0']
    #allocation5 [shape = 'u8[65536]{0}', space=vmem, size = 0x10000, scoped, tag = 'output window, operand 1']
    loop: start=0, step=1, limit=4
    $region2: #{dkt_forward.1} parent=1 // loop_pre_header
      _
    $region3: #{dkt_forward.1} parent=1 // loop_header
      %s18 = sphi 0, %s22
      %p19 = scmp.ge.s32.totalorder %s18, 4
      %s28 = sphi 0, %s30
      %s31 = sphi 0, %s28
      %s32 = sphi 0, %s31
      %s48 = sphi 0, %s32
      %s52 = sphi 0, %s52
      %s54 = sphi 0, %s52
      %s55 = sphi 0, %s54
      %s69 = sphi 0, %s55
      %s73 = sphi 0, %s73
      %s75 = sphi 0, %s73
      %s76 = sphi 0, %s75
      %s90 = sphi 0, %s76
      %s94 = sphi 0, %s94
      %s96 = sphi 0, %s94
      %s97 = sphi 0, %s96
      %s111 = sphi 0, %s97
      %s117 = sphi 0, %s119
      %s120 = sphi 0, %s117
      %s121 = sphi 0, %s120
      %s137 = sphi 0, %s121
      %s143 = sphi 0, %s145
      %s146 = sphi 0, %s143
      %s147 = sphi 0, %s146
      %s163 = sphi 0, %s147
      %s167 = sphi 0, %s167
      %s169 = sphi 0, %s167
      %s170 = sphi 0, %s169
      %s184 = sphi 0, %s170
      %s188 = sphi 0, %s188
      %s190 = sphi 0, %s188
      %s191 = sphi 0, %s190
      %s205 = sphi 0, %s191
      %s211 = sphi 0, %s213
      %s214 = sphi 0, %s211
      %s215 = sphi 0, %s214
      %s231 = sphi 0, %s215
      %s237 = sphi 0, %s239
      %s240 = sphi 0, %s237
      %s241 = sphi 0, %s240
      %s257 = sphi 0, %s241
      %s263 = sphi 0, %s265
      %s266 = sphi 0, %s263
      %s267 = sphi 0, %s266
      %s283 = sphi 0, %s267
      %s289 = sphi 0, %s291
      %s292 = sphi 0, %s289
      %s293 = sphi 0, %s292
      %s309 = sphi 0, %s293
    $region4: #{dkt_forward.1} parent=1 // loop_header_branch
      %21 = sbr.rel (%p19) target = $region8
    $region5: #{dkt_forward.1} parent=1 // loop_body
      %s23 = ssub.s32 %s18, 1
      %s24 = ssub.s32 %s18, 2
      %s25 = sadd.s32 %s18, 1
      %s26 = ssub.s32 %s18, %s25
      %p27 = scmp.eq.s32.totalorder %s26, 0
      %s29 = sadd.s32 %s28, 1
      %s30 = scalar_select %p27, %s28, %s29
      %p33 = pneg %p27
      %p34 = scmp.eq.s32.totalorder %s18, 1
      %p35 = por %p33, %p34
      %p36 = scmp.ne.s32.totalorder %s28, %s31
      %p37 = scmp.eq.s32.totalorder %s18, 0
      %p38 = por %p36, %p37
      %p39 = scmp.ne.s32.totalorder %s28, %s31
      %p40 = scmp.eq.s32.totalorder %s23, 1
      %p41 = por %p39, %p40
      %p42 = scmp.ne.s32.totalorder %s31, %s32
      %p43 = scmp.eq.s32.totalorder %s23, 0
      %p44 = por %p42, %p43
      %p45 = scmp.ne.s32.totalorder %s31, %s32
      %p46 = scmp.eq.s32.totalorder %s24, 1
      %p47 = por %p45, %p46
      %p49 = scmp.ne.s32.totalorder %s32, %s48
      %p50 = scmp.eq.s32.totalorder %s24, 0
      %p51 = por %p49, %p50
      %s53 = sadd.s32 %s52, 1
      %p56 = scmp.eq.s32.totalorder %s18, 1
      %p57 = scmp.ne.s32.totalorder %s52, %s54
      %p58 = scmp.eq.s32.totalorder %s18, 0
      %p59 = por %p57, %p58
      %p60 = scmp.ne.s32.totalorder %s52, %s54
      %p61 = scmp.eq.s32.totalorder %s23, 1
      %p62 = por %p60, %p61
      %p63 = scmp.ne.s32.totalorder %s54, %s55
      %p64 = scmp.eq.s32.totalorder %s23, 0
      %p65 = por %p63, %p64
      %p66 = scmp.ne.s32.totalorder %s54, %s55
      %p67 = scmp.eq.s32.totalorder %s24, 1
      %p68 = por %p66, %p67
      %p70 = scmp.ne.s32.totalorder %s55, %s69
      %p71 = scmp.eq.s32.totalorder %s24, 0
      %p72 = por %p70, %p71
      %s74 = sadd.s32 %s73, 1
      %p77 = scmp.eq.s32.totalorder %s18, 1
      %p78 = scmp.ne.s32.totalorder %s73, %s75
      %p79 = scmp.eq.s32.totalorder %s18, 0
      %p80 = por %p78, %p79
      %p81 = scmp.ne.s32.totalorder %s73, %s75
      %p82 = scmp.eq.s32.totalorder %s23, 1
      %p83 = por %p81, %p82
      %p84 = scmp.ne.s32.totalorder %s75, %s76
      %p85 = scmp.eq.s32.totalorder %s23, 0
      %p86 = por %p84, %p85
      %p87 = scmp.ne.s32.totalorder %s75, %s76
      %p88 = scmp.eq.s32.totalorder %s24, 1
      %p89 = por %p87, %p88
      %p91 = scmp.ne.s32.totalorder %s76, %s90
      %p92 = scmp.eq.s32.totalorder %s24, 0
      %p93 = por %p91, %p92
      %s95 = sadd.s32 %s94, 1
      %p98 = scmp.eq.s32.totalorder %s18, 1
      %p99 = scmp.ne.s32.totalorder %s94, %s96
      %p100 = scmp.eq.s32.totalorder %s18, 0
      %p101 = por %p99, %p100
      %p102 = scmp.ne.s32.totalorder %s94, %s96
      %p103 = scmp.eq.s32.totalorder %s23, 1
      %p104 = por %p102, %p103
      %p105 = scmp.ne.s32.totalorder %s96, %s97
      %p106 = scmp.eq.s32.totalorder %s23, 0
      %p107 = por %p105, %p106
      %p108 = scmp.ne.s32.totalorder %s96, %s97
      %p109 = scmp.eq.s32.totalorder %s24, 1
      %p110 = por %p108, %p109
      %p112 = scmp.ne.s32.totalorder %s97, %s111
      %p113 = scmp.eq.s32.totalorder %s24, 0
      %p114 = por %p112, %p113
      %s115 = ssub.s32 %s18, %s25
      %p116 = scmp.eq.s32.totalorder %s115, 0
      %s118 = sadd.s32 %s117, 1
      %s119 = scalar_select %p116, %s117, %s118
      %p122 = pneg %p116
      %p123 = scmp.eq.s32.totalorder %s18, 1
      %p124 = por %p122, %p123
      %p125 = scmp.ne.s32.totalorder %s117, %s120
      %p126 = scmp.eq.s32.totalorder %s18, 0
      %p127 = por %p125, %p126
      %p128 = scmp.ne.s32.totalorder %s117, %s120
      %p129 = scmp.eq.s32.totalorder %s23, 1
      %p130 = por %p128, %p129
      %p131 = scmp.ne.s32.totalorder %s120, %s121
      %p132 = scmp.eq.s32.totalorder %s23, 0
      %p133 = por %p131, %p132
      %p134 = scmp.ne.s32.totalorder %s120, %s121
      %p135 = scmp.eq.s32.totalorder %s24, 1
      %p136 = por %p134, %p135
      %p138 = scmp.ne.s32.totalorder %s121, %s137
      %p139 = scmp.eq.s32.totalorder %s24, 0
      %p140 = por %p138, %p139
      %s141 = ssub.s32 %s18, %s25
      %p142 = scmp.eq.s32.totalorder %s141, 0
      %s144 = sadd.s32 %s143, 1
      %s145 = scalar_select %p142, %s143, %s144
      %p148 = pneg %p142
      %p149 = scmp.eq.s32.totalorder %s18, 1
      %p150 = por %p148, %p149
      %p151 = scmp.ne.s32.totalorder %s143, %s146
      %p152 = scmp.eq.s32.totalorder %s18, 0
      %p153 = por %p151, %p152
      %p154 = scmp.ne.s32.totalorder %s143, %s146
      %p155 = scmp.eq.s32.totalorder %s23, 1
      %p156 = por %p154, %p155
      %p157 = scmp.ne.s32.totalorder %s146, %s147
      %p158 = scmp.eq.s32.totalorder %s23, 0
      %p159 = por %p157, %p158
      %p160 = scmp.ne.s32.totalorder %s146, %s147
      %p161 = scmp.eq.s32.totalorder %s24, 1
      %p162 = por %p160, %p161
      %p164 = scmp.ne.s32.totalorder %s147, %s163
      %p165 = scmp.eq.s32.totalorder %s24, 0
      %p166 = por %p164, %p165
      %s168 = sadd.s32 %s167, 1
      %p171 = scmp.eq.s32.totalorder %s18, 1
      %p172 = scmp.ne.s32.totalorder %s167, %s169
      %p173 = scmp.eq.s32.totalorder %s18, 0
      %p174 = por %p172, %p173
      %p175 = scmp.ne.s32.totalorder %s167, %s169
      %p176 = scmp.eq.s32.totalorder %s23, 1
      %p177 = por %p175, %p176
      %p178 = scmp.ne.s32.totalorder %s169, %s170
      %p179 = scmp.eq.s32.totalorder %s23, 0
      %p180 = por %p178, %p179
      %p181 = scmp.ne.s32.totalorder %s169, %s170
      %p182 = scmp.eq.s32.totalorder %s24, 1
      %p183 = por %p181, %p182
      %p185 = scmp.ne.s32.totalorder %s170, %s184
      %p186 = scmp.eq.s32.totalorder %s24, 0
      %p187 = por %p185, %p186
      %s189 = sadd.s32 %s188, 1
      %p192 = scmp.eq.s32.totalorder %s18, 1
      %p193 = scmp.ne.s32.totalorder %s188, %s190
      %p194 = scmp.eq.s32.totalorder %s18, 0
      %p195 = por %p193, %p194
      %p196 = scmp.ne.s32.totalorder %s188, %s190
      %p197 = scmp.eq.s32.totalorder %s23, 1
      %p198 = por %p196, %p197
      %p199 = scmp.ne.s32.totalorder %s190, %s191
      %p200 = scmp.eq.s32.totalorder %s23, 0
      %p201 = por %p199, %p200
      %p202 = scmp.ne.s32.totalorder %s190, %s191
      %p203 = scmp.eq.s32.totalorder %s24, 1
      %p204 = por %p202, %p203
      %p206 = scmp.ne.s32.totalorder %s191, %s205
      %p207 = scmp.eq.s32.totalorder %s24, 0
      %p208 = por %p206, %p207
      %s209 = ssub.s32 %s18, %s25
      %p210 = scmp.eq.s32.totalorder %s209, 0
      %s212 = sadd.s32 %s211, 1
      %s213 = scalar_select %p210, %s211, %s212
      %p216 = pneg %p210
      %p217 = scmp.eq.s32.totalorder %s18, 1
      %p218 = por %p216, %p217
      %p219 = scmp.ne.s32.totalorder %s211, %s214
      %p220 = scmp.eq.s32.totalorder %s18, 0
      %p221 = por %p219, %p220
      %p222 = scmp.ne.s32.totalorder %s211, %s214
      %p223 = scmp.eq.s32.totalorder %s23, 1
      %p224 = por %p222, %p223
      %p225 = scmp.ne.s32.totalorder %s214, %s215
      %p226 = scmp.eq.s32.totalorder %s23, 0
      %p227 = por %p225, %p226
      %p228 = scmp.ne.s32.totalorder %s214, %s215
      %p229 = scmp.eq.s32.totalorder %s24, 1
      %p230 = por %p228, %p229
      %p232 = scmp.ne.s32.totalorder %s215, %s231
      %p233 = scmp.eq.s32.totalorder %s24, 0
      %p234 = por %p232, %p233
      %s235 = ssub.s32 %s18, %s25
      %p236 = scmp.eq.s32.totalorder %s235, 0
      %s238 = sadd.s32 %s237, 1
      %s239 = scalar_select %p236, %s237, %s238
      %p242 = pneg %p236
      %p243 = scmp.eq.s32.totalorder %s18, 1
      %p244 = por %p242, %p243
      %p245 = scmp.ne.s32.totalorder %s237, %s240
      %p246 = scmp.eq.s32.totalorder %s18, 0
      %p247 = por %p245, %p246
      %p248 = scmp.ne.s32.totalorder %s237, %s240
      %p249 = scmp.eq.s32.totalorder %s23, 1
      %p250 = por %p248, %p249
      %p251 = scmp.ne.s32.totalorder %s240, %s241
      %p252 = scmp.eq.s32.totalorder %s23, 0
      %p253 = por %p251, %p252
      %p254 = scmp.ne.s32.totalorder %s240, %s241
      %p255 = scmp.eq.s32.totalorder %s24, 1
      %p256 = por %p254, %p255
      %p258 = scmp.ne.s32.totalorder %s241, %s257
      %p259 = scmp.eq.s32.totalorder %s24, 0
      %p260 = por %p258, %p259
      %s261 = ssub.s32 %s18, %s25
      %p262 = scmp.eq.s32.totalorder %s261, 0
      %s264 = sadd.s32 %s263, 1
      %s265 = scalar_select %p262, %s263, %s264
      %p268 = pneg %p262
      %p269 = scmp.eq.s32.totalorder %s18, 1
      %p270 = por %p268, %p269
      %p271 = scmp.ne.s32.totalorder %s263, %s266
      %p272 = scmp.eq.s32.totalorder %s18, 0
      %p273 = por %p271, %p272
      %p274 = scmp.ne.s32.totalorder %s263, %s266
      %p275 = scmp.eq.s32.totalorder %s23, 1
      %p276 = por %p274, %p275
      %p277 = scmp.ne.s32.totalorder %s266, %s267
      %p278 = scmp.eq.s32.totalorder %s23, 0
      %p279 = por %p277, %p278
      %p280 = scmp.ne.s32.totalorder %s266, %s267
      %p281 = scmp.eq.s32.totalorder %s24, 1
      %p282 = por %p280, %p281
      %p284 = scmp.ne.s32.totalorder %s267, %s283
      %p285 = scmp.eq.s32.totalorder %s24, 0
      %p286 = por %p284, %p285
      %s287 = ssub.s32 %s18, %s25
      %p288 = scmp.eq.s32.totalorder %s287, 0
      %s290 = sadd.s32 %s289, 1
      %s291 = scalar_select %p288, %s289, %s290
      %p294 = pneg %p288
      %p295 = scmp.eq.s32.totalorder %s18, 1
      %p296 = por %p294, %p295
      %p297 = scmp.ne.s32.totalorder %s289, %s292
      %p298 = scmp.eq.s32.totalorder %s18, 0
      %p299 = por %p297, %p298
      %p300 = scmp.ne.s32.totalorder %s289, %s292
      %p301 = scmp.eq.s32.totalorder %s23, 1
      %p302 = por %p300, %p301
      %p303 = scmp.ne.s32.totalorder %s292, %s293
      %p304 = scmp.eq.s32.totalorder %s23, 0
      %p305 = por %p303, %p304
      %p306 = scmp.ne.s32.totalorder %s292, %s293
      %p307 = scmp.eq.s32.totalorder %s24, 1
      %p308 = por %p306, %p307
      %p310 = scmp.ne.s32.totalorder %s293, %s309
      %p311 = scmp.eq.s32.totalorder %s24, 0
      %p312 = por %p310, %p311
      %p313 = scmp.le.s32.totalorder 1, %s18
      %p314 = scmp.lt.s32.totalorder %s18, 3
      %p315 = pnand %p313, %p314
      %p316 = pneg %p315
      // Predicated region
      $region9: #{dkt_forward.1} parent=5 // pred_check
        _
      $region10: #{dkt_forward.1} parent=5 // pred_check_branch
        %318 = sbr.rel (%p315) target = $region12
      $region11: #{dkt_forward.1} parent=5 // pred_region
        %s319 = ssub.s32 %s18, 1
        // Predicated region
        $region13: #{dkt_forward.1} parent=11 // pred_check
          %p320 = pneg %p65
        $region14: #{dkt_forward.1} parent=11 // pred_check_branch
          %322 = sbr.rel (%p320) target = $region16
        $region15: #{dkt_forward.1} parent=11 // pred_region
          _
        $region16: #{dkt_forward.1} parent=11 // pred_fallthru
          _
        // Predicated region
        $region17: #{dkt_forward.1} parent=11 // pred_check
          %p323 = pneg %p86
        $region18: #{dkt_forward.1} parent=11 // pred_check_branch
          %325 = sbr.rel (%p323) target = $region20
        $region19: #{dkt_forward.1} parent=11 // pred_region
          _
        $region20: #{dkt_forward.1} parent=11 // pred_fallthru
          _
        // Predicated region
        $region21: #{dkt_forward.1} parent=11 // pred_check
          %p326 = pneg %p107
        $region22: #{dkt_forward.1} parent=11 // pred_check_branch
          %328 = sbr.rel (%p326) target = $region24
        $region23: #{dkt_forward.1} parent=11 // pred_region
          _
        $region24: #{dkt_forward.1} parent=11 // pred_fallthru
          _
        // Predicated region
        $region25: #{dkt_forward.1} parent=11 // pred_check
          %p329 = pneg %p180
        $region26: #{dkt_forward.1} parent=11 // pred_check_branch
          %331 = sbr.rel (%p329) target = $region28
        $region27: #{dkt_forward.1} parent=11 // pred_region
          _
        $region28: #{dkt_forward.1} parent=11 // pred_fallthru
          _
        // Predicated region
        $region29: #{dkt_forward.1} parent=11 // pred_check
          %p332 = pneg %p201
        $region30: #{dkt_forward.1} parent=11 // pred_check_branch
          %334 = sbr.rel (%p332) target = $region32
        $region31: #{dkt_forward.1} parent=11 // pred_region
          _
        $region32: #{dkt_forward.1} parent=11 // pred_fallthru
          _
      $region12: #{dkt_forward.1} parent=5 // pred_fallthru
        _
      %p335 = scmp.lt.s32.totalorder %s18, 2
      // Predicated region
      $region33: #{dkt_forward.1} parent=5 // pred_check
        %p336 = pneg %p335
      $region34: #{dkt_forward.1} parent=5 // pred_check_branch
        %338 = sbr.rel (%p336) target = $region36
      $region35: #{dkt_forward.1} parent=5 // pred_region
        // Predicated region
        $region37: #{dkt_forward.1} parent=35 // pred_check
          %p339 = pneg %p38
        $region38: #{dkt_forward.1} parent=35 // pred_check_branch
          %341 = sbr.rel (%p339) target = $region40
        $region39: #{dkt_forward.1} parent=35 // pred_region
          %s342 = sand.u32 %s28, 1
          %s343 = sand.u32 %s28, 1
          %s344 = smul.addr %s343, 32
          %s345 = scalar_lea.vmem [#allocation3], %s344
          %s346 = smul.addr %s18, 4
          %s347 = scalar_lea.vmem %s0, %s346
          // Predicated region
          $region41: #{dkt_forward.1} parent=39 // pred_check
            _
          $region42: #{dkt_forward.1} parent=39 // pred_check_branch
            %349 = sbr.rel (0) target = $region44
          $region43: #{dkt_forward.1} parent=39 // pred_region
            // Predicated region
            $region45: #{dkt_forward.1} parent=43 // pred_check
              _
            $region46: #{dkt_forward.1} parent=43 // pred_check_branch
              %351 = sbr.rel target = $region48
            $region47: #{dkt_forward.1} parent=43 // pred_region
              // Predicated region
              $region60: #{dkt_forward.1} parent=47 // pred_check
                _
              $region61: #{dkt_forward.1} parent=47 // pred_check_branch
                %381 = sbr.rel (0) target = $region63
              $region62: #{dkt_forward.1} parent=47 // pred_region
                loop: start=0, step=1, limit=1
                $region64: #{dkt_forward.1} parent=62 // loop_pre_header
                  _
                $region65: #{dkt_forward.1} parent=62 // loop_header
                  %s383 = sphi 0, %s387
                  %p384 = scmp.ge.s32.totalorder %s383, 1
                  %s388 = sphi %s347, %s347
                  %s389 = sphi %s345, %s345
                $region66: #{dkt_forward.1} parent=62 // loop_header_branch
                  %386 = sbr.rel (%p384) target = $region70
                $region67: #{dkt_forward.1} parent=62 // loop_body
                  _
                $region68: #{dkt_forward.1} parent=62 // loop_footer
                  %s387 = sadd.s32 1, %s383
                $region69: #{dkt_forward.1} parent=62 // loop_footer_branch
                  %382 = sbr.rel target = $region65
                $region70: #{dkt_forward.1} parent=62 // loop_exit
                  _
                %s391 = ssub.s32 16, 1
                loop: start=0, step=1, limit=1
                $region71: #{dkt_forward.1} parent=62 // loop_pre_header
                  _
                $region72: #{dkt_forward.1} parent=62 // loop_header
                  %s393 = sphi 0, %s397
                  %p394 = scmp.ge.s32.totalorder %s393, 1
                  %s398 = sphi %s347, %s347
                  %s399 = sphi %s345, %s345
                $region73: #{dkt_forward.1} parent=62 // loop_header_branch
                  %396 = sbr.rel (%p394) target = $region77
                $region74: #{dkt_forward.1} parent=62 // loop_body
                  %v400 = vld [vmem:[%s398] sm:%s391]
                  %401 = vst [vmem:[%s399] sm:%s391] %v400
                  %v402 = vld [vmem:[%s398 + $0x8] sm:%s391]
                  %403 = vst [vmem:[%s399 + $0x4] sm:%s391] %v402
                  %v404 = vld [vmem:[%s398 + $0x10] sm:%s391]
                  %405 = vst [vmem:[%s399 + $0x8] sm:%s391] %v404
                  %v406 = vld [vmem:[%s398 + $0x18] sm:%s391]
                  %407 = vst [vmem:[%s399 + $0xc] sm:%s391] %v406
                  %v408 = vld [vmem:[%s398 + $0x20] sm:%s391]
                  %409 = vst [vmem:[%s399 + $0x10] sm:%s391] %v408
                  %v410 = vld [vmem:[%s398 + $0x28] sm:%s391]
                  %411 = vst [vmem:[%s399 + $0x14] sm:%s391] %v410
                  %v412 = vld [vmem:[%s398 + $0x30] sm:%s391]
                  %413 = vst [vmem:[%s399 + $0x18] sm:%s391] %v412
                  %v414 = vld [vmem:[%s398 + $0x38] sm:%s391]
                  %415 = vst [vmem:[%s399 + $0x1c] sm:%s391] %v414
                $region75: #{dkt_forward.1} parent=62 // loop_footer
                  %s397 = sadd.s32 1, %s393
                $region76: #{dkt_forward.1} parent=62 // loop_footer_branch
                  %392 = sbr.rel target = $region72
                $region77: #{dkt_forward.1} parent=62 // loop_exit
                  _
              $region63: #{dkt_forward.1} parent=47 // pred_fallthru
                _
            $region48: #{dkt_forward.1} parent=43 // pred_fallthru
              _
            // Predicated region
            $region49: #{dkt_forward.1} parent=43 // pred_check
              _
            $region50: #{dkt_forward.1} parent=43 // pred_check_branch
              %353 = sbr.rel (0) target = $region52
            $region51: #{dkt_forward.1} parent=43 // pred_region
              %s355 = ssub.s32 16, 1
              loop: start=0, step=1, limit=1
              $region53: #{dkt_forward.1} parent=51 // loop_pre_header
                _
              $region54: #{dkt_forward.1} parent=51 // loop_header
                %s357 = sphi 0, %s361
                %p358 = scmp.ge.s32.totalorder %s357, 1
                %s362 = sphi %s347, %s347
                %s363 = sphi %s345, %s345
              $region55: #{dkt_forward.1} parent=51 // loop_header_branch
                %360 = sbr.rel (%p358) target = $region59
              $region56: #{dkt_forward.1} parent=51 // loop_body
                %v364 = vld [vmem:[%s362] sm:%s355]
                %365 = vst [vmem:[%s363] sm:%s355] %v364
                %v366 = vld [vmem:[%s362 + $0x8] sm:%s355]
                %367 = vst [vmem:[%s363 + $0x4] sm:%s355] %v366
                %v368 = vld [vmem:[%s362 + $0x10] sm:%s355]
                %369 = vst [vmem:[%s363 + $0x8] sm:%s355] %v368
                %v370 = vld [vmem:[%s362 + $0x18] sm:%s355]
                %371 = vst [vmem:[%s363 + $0xc] sm:%s355] %v370
                %v372 = vld [vmem:[%s362 + $0x20] sm:%s355]
                %373 = vst [vmem:[%s363 + $0x10] sm:%s355] %v372
                %v374 = vld [vmem:[%s362 + $0x28] sm:%s355]
                %375 = vst [vmem:[%s363 + $0x14] sm:%s355] %v374
                %v376 = vld [vmem:[%s362 + $0x30] sm:%s355]
                %377 = vst [vmem:[%s363 + $0x18] sm:%s355] %v376
                %v378 = vld [vmem:[%s362 + $0x38] sm:%s355]
                %379 = vst [vmem:[%s363 + $0x1c] sm:%s355] %v378
              $region57: #{dkt_forward.1} parent=51 // loop_footer
                %s361 = sadd.s32 1, %s357
              $region58: #{dkt_forward.1} parent=51 // loop_footer_branch
                %356 = sbr.rel target = $region54
              $region59: #{dkt_forward.1} parent=51 // loop_exit
                _
            $region52: #{dkt_forward.1} parent=43 // pred_fallthru
              _
          $region44: #{dkt_forward.1} parent=39 // pred_fallthru
            _
          %416 = vnop
        $region40: #{dkt_forward.1} parent=35 // pred_fallthru
          _
        // Predicated region
        $region78: #{dkt_forward.1} parent=35 // pred_check
          %p417 = pneg %p127
        $region79: #{dkt_forward.1} parent=35 // pred_check_branch
          %419 = sbr.rel (%p417) target = $region81
        $region80: #{dkt_forward.1} parent=35 // pred_region
          %p420 = scmp.lt.s32.totalorder %s18, 1
          %s421 = scalar_select %p420, %s18, 1
          %s422 = smul.addr %s421, 8
          %s423 = scalar_lea.vmem %s4, %s422
        $region81: #{dkt_forward.1} parent=35 // pred_fallthru
          _
        // Predicated region
        $region82: #{dkt_forward.1} parent=35 // pred_check
          %p424 = pneg %p153
        $region83: #{dkt_forward.1} parent=35 // pred_check_branch
          %426 = sbr.rel (%p424) target = $region85
        $region84: #{dkt_forward.1} parent=35 // pred_region
          %p427 = scmp.lt.s32.totalorder %s18, 1
          %s428 = scalar_select %p427, %s18, 1
          %s429 = smul.addr %s428, 8
          %s430 = scalar_lea.vmem %s5, %s429
        $region85: #{dkt_forward.1} parent=35 // pred_fallthru
          _
      $region36: #{dkt_forward.1} parent=5 // pred_fallthru
        _
      %p431 = scmp.le.s32.totalorder 1, %s18
      %p432 = scmp.lt.s32.totalorder %s18, 3
      %p433 = pnand %p431, %p432
      %p434 = pneg %p433
      // Predicated region
      $region86: #{dkt_forward.1} parent=5 // pred_check
        _
      $region87: #{dkt_forward.1} parent=5 // pred_check_branch
        %436 = sbr.rel (%p433) target = $region89
      $region88: #{dkt_forward.1} parent=5 // pred_region
        %s437 = ssub.s32 %s18, 1
        %s438 = sand.u32 %s31, 1
        %s439 = sand.u32 %s31, 1
        %s440 = smul.addr %s439, 32
        %s441 = scalar_lea.vmem [#allocation3], %s440
        // Predicated region
        $region90: #{dkt_forward.1} parent=88 // pred_check
          %p442 = pneg %p44
        $region91: #{dkt_forward.1} parent=88 // pred_check_branch
          %444 = sbr.rel (%p442) target = $region93
        $region92: #{dkt_forward.1} parent=88 // pred_region
          _
        $region93: #{dkt_forward.1} parent=88 // pred_fallthru
          _
        %s445 = sand.u32 %s31, 1
        %s446 = sand.u32 %s31, 1
        %s447 = smul.addr %s446, 32
        %s448 = scalar_lea.vmem [#allocation3], %s447
        %p449 = pneg %p44
        %p450 = pneg %p41
        %p451 = pneg %p65
        %p452 = pneg %p62
        %p453 = pneg %p86
        %p454 = pneg %p83
        %p455 = pneg %p107
        %p456 = pneg %p104
        %p457 = scmp.lt.s32.totalorder %s23, 1
        %s458 = scalar_select %p457, %s23, 1
        %s459 = smul.addr %s458, 8
        %s460 = scalar_lea.vmem %s4, %s459
        %p461 = pneg %p133
        %p462 = pneg %p130
        %p463 = scmp.lt.s32.totalorder %s23, 1
        %s464 = scalar_select %p463, %s23, 1
        %s465 = smul.addr %s464, 8
        %s466 = scalar_lea.vmem %s5, %s465
        %p467 = pneg %p159
        %p468 = pneg %p156
        %p469 = pneg %p180
        %p470 = pneg %p177
        %p471 = pneg %p201
        %p472 = pneg %p198
        %p473 = pneg %p227
        %p474 = pneg %p224
        %s475 = sand.u32 %s214, 1
        %s476 = sand.u32 %s214, 1
        %s477 = smul.addr %s476, 64
        %s478 = scalar_lea.vmem [#allocation4], %s477
        %p479 = pneg %p253
        %p480 = pneg %p250
        %s481 = sand.u32 %s240, 1
        %s482 = sand.u32 %s240, 1
        %s483 = smul.addr %s482, 64
        %s484 = scalar_lea.vmem [#allocation5], %s483
        %p485 = pneg %p279
        %p486 = pneg %p276
        %p487 = scmp.lt.s32.totalorder %s23, 1
        %s488 = scalar_select %p487, %s23, 1
        %s489 = smul.addr %s488, 8
        %s490 = scalar_lea.vmem %s10, %s489
        %p491 = pneg %p305
        %p492 = pneg %p302
        %p493 = scmp.lt.s32.totalorder %s23, 1
        %s494 = scalar_select %p493, %s23, 1
        %s495 = smul.addr %s494, 8
        %s496 = scalar_lea.vmem %s11, %s495
        %p497 = scmp.lt.s32.totalorder %s23, 1
        %s498 = scalar_select %p497, %s23, 1
        %s499 = smul.addr %s498, 8
        %s500 = scalar_lea.vmem %s4, %s499
        %p501 = scmp.lt.s32.totalorder %s23, 1
        %s502 = scalar_select %p501, %s23, 1
        %s503 = smul.addr %s502, 8
        %s504 = scalar_lea.vmem %s5, %s503
        %p505 = scmp.lt.s32.totalorder %s23, 1
        %s506 = scalar_select %p505, %s23, 1
        %s507 = smul.addr %s506, 8
        %s508 = scalar_lea.vmem %s10, %s507
        %p509 = scmp.lt.s32.totalorder %s23, 1
        %s510 = scalar_select %p509, %s23, 1
        %s511 = smul.addr %s510, 8
        %s512 = scalar_lea.vmem %s11, %s511
        %v514 = vld [vmem:[%s441] sm:$0xf]
        %v515 = vld [vmem:[%s441 + $0x4] sm:$0xf]
        %v516 = vld [vmem:[%s441 + $0x8] sm:$0xf]
        %v517 = vld [vmem:[%s441 + $0xc] sm:$0xf]
        %v518 = vld [vmem:[%s441 + $0x10] sm:$0xf]
        %v519 = vld [vmem:[%s441 + $0x14] sm:$0xf]
        %v520 = vld [vmem:[%s441 + $0x18] sm:$0xf]
        %v521 = vld [vmem:[%s441 + $0x1c] sm:$0xf]
        %v522 = vld [vmem:[%s1] sm:$0xff]
        %v523 = vld [vmem:[%s1 + $0x8] sm:$0xff]
        %v524 = vld [vmem:[%s1 + $0x10] sm:$0xff]
        %v525 = vld [vmem:[%s1 + $0x18] sm:$0xff]
        %v526 = vld [vmem:[%s1 + $0x20] sm:$0xff]
        %v527 = vld [vmem:[%s1 + $0x28] sm:$0xff]
        %v528 = vld [vmem:[%s1 + $0x30] sm:$0xff]
        %v529 = vld [vmem:[%s1 + $0x38] sm:$0xff]
        %v530 = vld [vmem:[%s3] sm:$0xf]
        %v532 = vlaneseq
        %v533 = vshrl.u32 %v532, 7
        %v534 = vsub.s32 0, %v533
        %v535 = vrot.slane %v530, %v534
        %v536 = vlaneseq
        %v537 = vshrl.u32 %v536, 7
        %v538 = vsub.s32 1, %v537
        %v539 = vrot.slane %v530, %v538
        %v540 = vlaneseq
        %v541 = vshrl.u32 %v540, 7
        %v542 = vsub.s32 2, %v541
        %v543 = vrot.slane %v530, %v542
        %v544 = vlaneseq
        %v545 = vshrl.u32 %v544, 7
        %v546 = vsub.s32 3, %v545
        %v547 = vrot.slane %v530, %v546
        %v560 = vunpack.c.l.b16 %v514
        %v561 = vunpack.c.l.b16 %v515
        %v562 = vunpack.c.l.b16 %v516
        %v563 = vunpack.c.l.b16 %v517
        %v564 = vunpack.c.l.b16 %v518
        %v565 = vunpack.c.l.b16 %v519
        %v566 = vunpack.c.l.b16 %v520
        %v567 = vunpack.c.l.b16 %v521
        %v568 = vpack.c.b16 %v561, %v560
        %v569 = vpack.c.b16 %v563, %v562
        %v570 = vpack.c.b16 %v565, %v564
        %v571 = vpack.c.b16 %v567, %v566
        %v580 = vunpack.c.l.b16 %v522
        %v581 = vunpack.c.h.b16 %v522
        %v582 = vunpack.c.l.b16 %v523
        %v583 = vunpack.c.h.b16 %v523
        %v584 = vunpack.c.l.b16 %v524
        %v585 = vunpack.c.h.b16 %v524
        %v586 = vunpack.c.l.b16 %v525
        %v587 = vunpack.c.h.b16 %v525
        %v588 = vunpack.c.l.b16 %v526
        %v589 = vunpack.c.h.b16 %v526
        %v590 = vunpack.c.l.b16 %v527
        %v591 = vunpack.c.h.b16 %v527
        %v592 = vunpack.c.l.b16 %v528
        %v593 = vunpack.c.h.b16 %v528
        %v594 = vunpack.c.l.b16 %v529
        %v595 = vunpack.c.h.b16 %v529
        %v596 = vpack.c.b16 %v584, %v580
        %v597 = vpack.c.b16 %v585, %v581
        %v598 = vpack.c.b16 %v586, %v582
        %v599 = vpack.c.b16 %v587, %v583
        %v600 = vpack.c.b16 %v592, %v588
        %v601 = vpack.c.b16 %v593, %v589
        %v602 = vpack.c.b16 %v594, %v590
        %v603 = vpack.c.b16 %v595, %v591
        %vm612 = vcmask 261120
        %v614 = vsel %vm612, %v568, 0
        %v617 = vsel %vm612, %v569, 0
        %v620 = vsel %vm612, %v570, 0
        %v623 = vsel %vm612, %v571, 0
        %625 = vmatprep.subr.bf16.mxu0 0
        %626 = vmatpush1.bf16.msra.mxu0 0
        %627 = vmatprep.subr.bf16.mxu0 0
        %628 = vmatpush1.bf16.msra.mxu0 0
        %629 = vmatprep.subr.bf16.mxu0 0
        %630 = vmatpush1.bf16.msra.mxu0 0
        %631 = vmatprep.subr.bf16.mxu0 0
        %632 = vmatpush1.bf16.msra.mxu0 0
        %633 = vmatprep.subr.bf16.mxu0 0
        %634 = vmatpush1.bf16.msra.mxu0 0
        %635 = vmatprep.subr.bf16.mxu0 0
        %636 = vmatpush1.bf16.msra.mxu0 0
        %637 = vmatprep.subr.bf16.mxu0 %v601
        %638 = vmatpush1.bf16.msra.mxu0 %v600
        %639 = vmatprep.subr.bf16.mxu0 %v597
        %640 = vmatpush1.bf16.msra.mxu0 %v596
        %641 = vmatprep.subr.bf16.mxu0 0
        %642 = vmatpush2.bf16.msra.mxu0 0
        %643 = vmatprep.subr.bf16.mxu0 0
        %644 = vmatpush2.bf16.msra.mxu0 0
        %645 = vmatprep.subr.bf16.mxu0 0
        %646 = vmatpush2.bf16.msra.mxu0 0
        %647 = vmatprep.subr.bf16.mxu0 0
        %648 = vmatpush2.bf16.msra.mxu0 0
        %649 = vmatprep.subr.bf16.mxu0 0
        %650 = vmatpush2.bf16.msra.mxu0 0
        %651 = vmatprep.subr.bf16.mxu0 0
        %652 = vmatpush2.bf16.msra.mxu0 0
        %653 = vmatprep.subr.bf16.mxu0 0
        %654 = vmatpush2.bf16.msra.mxu0 0
        %655 = vmatprep.subr.bf16.mxu0 0
        %656 = vmatpush2.bf16.msra.mxu0 0
        %657 = vmatprep.mubr.bf16.mxu0 0
        %658 = vmatmul.mubr.bf16.gmra.mxu0 %v614
        %v659 = vpop.f32.mrf.mxu0
        %v660 = vadd.f32 %v535, %v659
        %v661 = vpop.f32.mrf.mxu0
        %v662 = vadd.f32 %v539, %v661
        %v663 = vpop.f32.mrf.mxu0
        %v664 = vadd.f32 %v535, %v663
        %v665 = vpop.f32.mrf.mxu0
        %v666 = vadd.f32 %v539, %v665
        %667 = vmatprep.mubr.bf16.mxu0 0
        %668 = vmatmul.mubr.bf16.gmra.mxu0 %v617
        %v669 = vpop.f32.mrf.mxu0
        %v670 = vadd.f32 %v535, %v669
        %v671 = vpop.f32.mrf.mxu0
        %v672 = vadd.f32 %v539, %v671
        %v673 = vpop.f32.mrf.mxu0
        %v674 = vadd.f32 %v535, %v673
        %v675 = vpop.f32.mrf.mxu0
        %v676 = vadd.f32 %v539, %v675
        %677 = vmatprep.mubr.bf16.mxu0 0
        %678 = vmatmul.mubr.bf16.gmra.mxu0 %v620
        %v679 = vpop.f32.mrf.mxu0
        %v680 = vadd.f32 %v535, %v679
        %v681 = vpop.f32.mrf.mxu0
        %v682 = vadd.f32 %v539, %v681
        %v683 = vpop.f32.mrf.mxu0
        %v684 = vadd.f32 %v535, %v683
        %v685 = vpop.f32.mrf.mxu0
        %v686 = vadd.f32 %v539, %v685
        %687 = vmatprep.mubr.bf16.mxu0 0
        %688 = vmatmul.mubr.bf16.gmra.mxu0 %v623
        %v689 = vpop.f32.mrf.mxu0
        %v690 = vadd.f32 %v535, %v689
        %v691 = vpop.f32.mrf.mxu0
        %v692 = vadd.f32 %v539, %v691
        %v693 = vpop.f32.mrf.mxu0
        %v694 = vadd.f32 %v535, %v693
        %v695 = vpop.f32.mrf.mxu0
        %v696 = vadd.f32 %v539, %v695
        %697 = vdwg.mxu0
        %698 = vmatprep.subr.bf16.mxu0 0
        %699 = vmatpush1.bf16.msra.mxu0 0
        %700 = vmatprep.subr.bf16.mxu0 0
        %701 = vmatpush1.bf16.msra.mxu0 0
        %702 = vmatprep.subr.bf16.mxu0 0
        %703 = vmatpush1.bf16.msra.mxu0 0
        %704 = vmatprep.subr.bf16.mxu0 0
        %705 = vmatpush1.bf16.msra.mxu0 0
        %706 = vmatprep.subr.bf16.mxu0 0
        %707 = vmatpush1.bf16.msra.mxu0 0
        %708 = vmatprep.subr.bf16.mxu0 0
        %709 = vmatpush1.bf16.msra.mxu0 0
        %710 = vmatprep.subr.bf16.mxu0 %v603
        %711 = vmatpush1.bf16.msra.mxu0 %v602
        %712 = vmatprep.subr.bf16.mxu0 %v599
        %713 = vmatpush1.bf16.msra.mxu0 %v598
        %714 = vmatprep.subr.bf16.mxu0 0
        %715 = vmatpush2.bf16.msra.mxu0 0
        %716 = vmatprep.subr.bf16.mxu0 0
        %717 = vmatpush2.bf16.msra.mxu0 0
        %718 = vmatprep.subr.bf16.mxu0 0
        %719 = vmatpush2.bf16.msra.mxu0 0
        %720 = vmatprep.subr.bf16.mxu0 0
        %721 = vmatpush2.bf16.msra.mxu0 0
        %722 = vmatprep.subr.bf16.mxu0 0
        %723 = vmatpush2.bf16.msra.mxu0 0
        %724 = vmatprep.subr.bf16.mxu0 0
        %725 = vmatpush2.bf16.msra.mxu0 0
        %726 = vmatprep.subr.bf16.mxu0 0
        %727 = vmatpush2.bf16.msra.mxu0 0
        %728 = vmatprep.subr.bf16.mxu0 0
        %729 = vmatpush2.bf16.msra.mxu0 0
        %730 = vmatprep.mubr.bf16.mxu0 0
        %731 = vmatmul.mubr.bf16.gmra.mxu0 %v614
        %v732 = vpop.f32.mrf.mxu0
        %v733 = vadd.f32 %v543, %v732
        %v734 = vpop.f32.mrf.mxu0
        %v735 = vadd.f32 %v547, %v734
        %v736 = vpop.f32.mrf.mxu0
        %v737 = vadd.f32 %v543, %v736
        %v738 = vpop.f32.mrf.mxu0
        %v739 = vadd.f32 %v547, %v738
        %740 = vmatprep.mubr.bf16.mxu0 0
        %741 = vmatmul.mubr.bf16.gmra.mxu0 %v617
        %v742 = vpop.f32.mrf.mxu0
        %v743 = vadd.f32 %v543, %v742
        %v744 = vpop.f32.mrf.mxu0
        %v745 = vadd.f32 %v547, %v744
        %v746 = vpop.f32.mrf.mxu0
        %v747 = vadd.f32 %v543, %v746
        %v748 = vpop.f32.mrf.mxu0
        %v749 = vadd.f32 %v547, %v748
        %750 = vmatprep.mubr.bf16.mxu0 0
        %751 = vmatmul.mubr.bf16.gmra.mxu0 %v620
        %v752 = vpop.f32.mrf.mxu0
        %v753 = vadd.f32 %v543, %v752
        %v754 = vpop.f32.mrf.mxu0
        %v755 = vadd.f32 %v547, %v754
        %v756 = vpop.f32.mrf.mxu0
        %v757 = vadd.f32 %v543, %v756
        %v758 = vpop.f32.mrf.mxu0
        %v759 = vadd.f32 %v547, %v758
        %760 = vmatprep.mubr.bf16.mxu0 0
        %761 = vmatmul.mubr.bf16.gmra.mxu0 %v623
        %v762 = vpop.f32.mrf.mxu0
        %v763 = vadd.f32 %v543, %v762
        %v764 = vpop.f32.mrf.mxu0
        %v765 = vadd.f32 %v547, %v764
        %v766 = vpop.f32.mrf.mxu0
        %v767 = vadd.f32 %v543, %v766
        %v768 = vpop.f32.mrf.mxu0
        %v769 = vadd.f32 %v547, %v768
        %770 = vdwg.mxu0
        %771 = vst [vmem:[#allocation2] sm:$0xff] %v660
        %772 = vst [vmem:[#allocation2 + $0x8] sm:$0xff] %v662
        %773 = vst [vmem:[#allocation2 + $0x10] sm:$0xff] %v733
        %774 = vst [vmem:[#allocation2 + $0x18] sm:$0xff] %v735
        %775 = vst [vmem:[#allocation2 + $0x20] sm:$0xff] %v664
        %776 = vst [vmem:[#allocation2 + $0x28] sm:$0xff] %v666
        %777 = vst [vmem:[#allocation2 + $0x30] sm:$0xff] %v737
        %778 = vst [vmem:[#allocation2 + $0x38] sm:$0xff] %v739
        %779 = vst [vmem:[#allocation2 + $0x40] sm:$0xff] %v670
        %780 = vst [vmem:[#allocation2 + $0x48] sm:$0xff] %v672
        %781 = vst [vmem:[#allocation2 + $0x50] sm:$0xff] %v743
        %782 = vst [vmem:[#allocation2 + $0x58] sm:$0xff] %v745
        %783 = vst [vmem:[#allocation2 + $0x60] sm:$0xff] %v674
        %784 = vst [vmem:[#allocation2 + $0x68] sm:$0xff] %v676
        %785 = vst [vmem:[#allocation2 + $0x70] sm:$0xff] %v747
        %786 = vst [vmem:[#allocation2 + $0x78] sm:$0xff] %v749
        %787 = vst [vmem:[#allocation2 + $0x80] sm:$0xff] %v680
        %788 = vst [vmem:[#allocation2 + $0x88] sm:$0xff] %v682
        %789 = vst [vmem:[#allocation2 + $0x90] sm:$0xff] %v753
        %790 = vst [vmem:[#allocation2 + $0x98] sm:$0xff] %v755
        %791 = vst [vmem:[#allocation2 + $0xa0] sm:$0xff] %v684
        %792 = vst [vmem:[#allocation2 + $0xa8] sm:$0xff] %v686
        %793 = vst [vmem:[#allocation2 + $0xb0] sm:$0xff] %v757
        %794 = vst [vmem:[#allocation2 + $0xb8] sm:$0xff] %v759
        %795 = vst [vmem:[#allocation2 + $0xc0] sm:$0xff] %v690
        %796 = vst [vmem:[#allocation2 + $0xc8] sm:$0xff] %v692
        %797 = vst [vmem:[#allocation2 + $0xd0] sm:$0xff] %v763
        %798 = vst [vmem:[#allocation2 + $0xd8] sm:$0xff] %v765
        %799 = vst [vmem:[#allocation2 + $0xe0] sm:$0xff] %v694
        %800 = vst [vmem:[#allocation2 + $0xe8] sm:$0xff] %v696
        %801 = vst [vmem:[#allocation2 + $0xf0] sm:$0xff] %v767
        %802 = vst [vmem:[#allocation2 + $0xf8] sm:$0xff] %v769
        %v803 = vld [vmem:[%s2] sm:$0xff]
        %v804 = vld [vmem:[%s2 + $0x8] sm:$0xff]
        %v805 = vld [vmem:[%s2 + $0x10] sm:$0xff]
        %v806 = vld [vmem:[%s2 + $0x18] sm:$0xff]
        %v807 = vld [vmem:[%s2 + $0x20] sm:$0xff]
        %v808 = vld [vmem:[%s2 + $0x28] sm:$0xff]
        %v809 = vld [vmem:[%s2 + $0x30] sm:$0xff]
        %v810 = vld [vmem:[%s2 + $0x38] sm:$0xff]
        %v811 = vld [vmem:[%s2 + $0x40] sm:$0xff]
        %v812 = vld [vmem:[%s2 + $0x48] sm:$0xff]
        %v813 = vld [vmem:[%s2 + $0x50] sm:$0xff]
        %v814 = vld [vmem:[%s2 + $0x58] sm:$0xff]
        %v815 = vld [vmem:[%s2 + $0x60] sm:$0xff]
        %v816 = vld [vmem:[%s2 + $0x68] sm:$0xff]
        %v817 = vld [vmem:[%s2 + $0x70] sm:$0xff]
        %v818 = vld [vmem:[%s2 + $0x78] sm:$0xff]
        %v819 = vld [vmem:[%s2 + $0x80] sm:$0xff]
        %v820 = vld [vmem:[%s2 + $0x88] sm:$0xff]
        %v821 = vld [vmem:[%s2 + $0x90] sm:$0xff]
        %v822 = vld [vmem:[%s2 + $0x98] sm:$0xff]
        %v823 = vld [vmem:[%s2 + $0xa0] sm:$0xff]
        %v824 = vld [vmem:[%s2 + $0xa8] sm:$0xff]
        %v825 = vld [vmem:[%s2 + $0xb0] sm:$0xff]
        %v826 = vld [vmem:[%s2 + $0xb8] sm:$0xff]
        %v827 = vld [vmem:[%s2 + $0xc0] sm:$0xff]
        %v828 = vld [vmem:[%s2 + $0xc8] sm:$0xff]
        %v829 = vld [vmem:[%s2 + $0xd0] sm:$0xff]
        %v830 = vld [vmem:[%s2 + $0xd8] sm:$0xff]
        %v831 = vld [vmem:[%s2 + $0xe0] sm:$0xff]
        %v832 = vld [vmem:[%s2 + $0xe8] sm:$0xff]
        %v833 = vld [vmem:[%s2 + $0xf0] sm:$0xff]
        %v834 = vld [vmem:[%s2 + $0xf8] sm:$0xff]
        %v835 = vld [vmem:[%s500] sm:$0xff]
        %v836 = vld [vmem:[%s504] sm:$0xff]
        %v837 = vld [vmem:[#allocation2] sm:$0xff]
        %v838 = vld [vmem:[#allocation2 + $0x8] sm:$0xff]
        %v839 = vld [vmem:[#allocation2 + $0x10] sm:$0xff]
        %v840 = vld [vmem:[#allocation2 + $0x18] sm:$0xff]
        %v841 = vpack.c.bf16 %v835, %v835
        %v874 = vunpack.c.l.b16 %v803
        %v875 = vunpack.c.h.b16 %v803
        %v876 = vunpack.c.l.b16 %v804
        %v877 = vunpack.c.h.b16 %v804
        %v878 = vunpack.c.l.b16 %v805
        %v879 = vunpack.c.h.b16 %v805
        %v880 = vunpack.c.l.b16 %v806
        %v881 = vunpack.c.h.b16 %v806
        %v882 = vunpack.c.l.b16 %v807
        %v883 = vunpack.c.h.b16 %v807
        %v884 = vunpack.c.l.b16 %v808
        %v885 = vunpack.c.h.b16 %v808
        %v886 = vunpack.c.l.b16 %v809
        %v887 = vunpack.c.h.b16 %v809
        %v888 = vunpack.c.l.b16 %v810
        %v889 = vunpack.c.h.b16 %v810
        %v890 = vunpack.c.l.b16 %v811
        %v891 = vunpack.c.h.b16 %v811
        %v892 = vunpack.c.l.b16 %v812
        %v893 = vunpack.c.h.b16 %v812
        %v894 = vunpack.c.l.b16 %v813
        %v895 = vunpack.c.h.b16 %v813
        %v896 = vunpack.c.l.b16 %v814
        %v897 = vunpack.c.h.b16 %v814
        %v898 = vunpack.c.l.b16 %v815
        %v899 = vunpack.c.h.b16 %v815
        %v900 = vunpack.c.l.b16 %v816
        %v901 = vunpack.c.h.b16 %v816
        %v902 = vunpack.c.l.b16 %v817
        %v903 = vunpack.c.h.b16 %v817
        %v904 = vunpack.c.l.b16 %v818
        %v905 = vunpack.c.h.b16 %v818
        %v906 = vunpack.c.l.b16 %v819
        %v907 = vunpack.c.h.b16 %v819
        %v908 = vunpack.c.l.b16 %v820
        %v909 = vunpack.c.h.b16 %v820
        %v910 = vunpack.c.l.b16 %v821
        %v911 = vunpack.c.h.b16 %v821
        %v912 = vunpack.c.l.b16 %v822
        %v913 = vunpack.c.h.b16 %v822
        %v914 = vunpack.c.l.b16 %v823
        %v915 = vunpack.c.h.b16 %v823
        %v916 = vunpack.c.l.b16 %v824
        %v917 = vunpack.c.h.b16 %v824
        %v918 = vunpack.c.l.b16 %v825
        %v919 = vunpack.c.h.b16 %v825
        %v920 = vunpack.c.l.b16 %v826
        %v921 = vunpack.c.h.b16 %v826
        %v922 = vunpack.c.l.b16 %v827
        %v923 = vunpack.c.h.b16 %v827
        %v924 = vunpack.c.l.b16 %v828
        %v925 = vunpack.c.h.b16 %v828
        %v926 = vunpack.c.l.b16 %v829
        %v927 = vunpack.c.h.b16 %v829
        %v928 = vunpack.c.l.b16 %v830
        %v929 = vunpack.c.h.b16 %v830
        %v930 = vunpack.c.l.b16 %v831
        %v931 = vunpack.c.h.b16 %v831
        %v932 = vunpack.c.l.b16 %v832
        %v933 = vunpack.c.h.b16 %v832
        %v934 = vunpack.c.l.b16 %v833
        %v935 = vunpack.c.h.b16 %v833
        %v936 = vunpack.c.l.b16 %v834
        %v937 = vunpack.c.h.b16 %v834
        %v938 = vpack.c.b16 %v878, %v874
        %v939 = vpack.c.b16 %v879, %v875
        %v940 = vpack.c.b16 %v880, %v876
        %v941 = vpack.c.b16 %v881, %v877
        %v942 = vpack.c.b16 %v886, %v882
        %v943 = vpack.c.b16 %v887, %v883
        %v944 = vpack.c.b16 %v888, %v884
        %v945 = vpack.c.b16 %v889, %v885
        %v946 = vpack.c.b16 %v894, %v890
        %v947 = vpack.c.b16 %v895, %v891
        %v948 = vpack.c.b16 %v896, %v892
        %v949 = vpack.c.b16 %v897, %v893
        %v950 = vpack.c.b16 %v902, %v898
        %v951 = vpack.c.b16 %v903, %v899
        %v952 = vpack.c.b16 %v904, %v900
        %v953 = vpack.c.b16 %v905, %v901
        %v954 = vpack.c.b16 %v910, %v906
        %v955 = vpack.c.b16 %v911, %v907
        %v956 = vpack.c.b16 %v912, %v908
        %v957 = vpack.c.b16 %v913, %v909
        %v958 = vpack.c.b16 %v918, %v914
        %v959 = vpack.c.b16 %v919, %v915
        %v960 = vpack.c.b16 %v920, %v916
        %v961 = vpack.c.b16 %v921, %v917
        %v962 = vpack.c.b16 %v926, %v922
        %v963 = vpack.c.b16 %v927, %v923
        %v964 = vpack.c.b16 %v928, %v924
        %v965 = vpack.c.b16 %v929, %v925
        %v966 = vpack.c.b16 %v934, %v930
        %v967 = vpack.c.b16 %v935, %v931
        %v968 = vpack.c.b16 %v936, %v932
        %v969 = vpack.c.b16 %v937, %v933
        %1002 = vmatprep.subr.bf16.mxu0 %v967
        %1003 = vmatpush1.bf16.msra.mxu0 %v966
        %1004 = vmatprep.subr.bf16.mxu0 %v963
        %1005 = vmatpush1.bf16.msra.mxu0 %v962
        %1006 = vmatprep.subr.bf16.mxu0 %v959
        %1007 = vmatpush1.bf16.msra.mxu0 %v958
        %1008 = vmatprep.subr.bf16.mxu0 %v955
        %1009 = vmatpush1.bf16.msra.mxu0 %v954
        %1010 = vmatprep.subr.bf16.mxu0 %v951
        %1011 = vmatpush1.bf16.msra.mxu0 %v950
        %1012 = vmatprep.subr.bf16.mxu0 %v947
        %1013 = vmatpush1.bf16.msra.mxu0 %v946
        %1014 = vmatprep.subr.bf16.mxu0 %v943
        %1015 = vmatpush1.bf16.msra.mxu0 %v942
        %1016 = vmatprep.subr.bf16.mxu0 %v939
        %1017 = vmatpush1.bf16.msra.mxu0 %v938
        %1018 = vmatprep.subr.bf16.mxu0 0
        %1019 = vmatpush2.bf16.msra.mxu0 0
        %1020 = vmatprep.subr.bf16.mxu0 0
        %1021 = vmatpush2.bf16.msra.mxu0 0
        %1022 = vmatprep.subr.bf16.mxu0 0
        %1023 = vmatpush2.bf16.msra.mxu0 0
        %1024 = vmatprep.subr.bf16.mxu0 0
        %1025 = vmatpush2.bf16.msra.mxu0 0
        %1026 = vmatprep.subr.bf16.mxu0 0
        %1027 = vmatpush2.bf16.msra.mxu0 0
        %1028 = vmatprep.subr.bf16.mxu0 0
        %1029 = vmatpush2.bf16.msra.mxu0 0
        %1030 = vmatprep.subr.bf16.mxu0 0
        %1031 = vmatpush2.bf16.msra.mxu0 0
        %1032 = vmatprep.subr.bf16.mxu0 0
        %1033 = vmatpush2.bf16.msra.mxu0 0
        %1034 = vmatprep.mubr.bf16.mxu0 0
        %1035 = vmatmul.mubr.bf16.gmra.mxu0 %v841
        %v1036 = vpop.f32.mrf.mxu0
        %v1037 = vadd.f32 0.0, %v1036
        %v1038 = vpop.f32.mrf.mxu0
        %v1039 = vadd.f32 0.0, %v1038
        %v1040 = vpop.f32.mrf.mxu0
        %v1041 = vpop.f32.mrf.mxu0
        %1042 = vdwg.mxu0
        %1043 = vmatprep.subr.bf16.mxu0 %v969
        %1044 = vmatpush1.bf16.msra.mxu0 %v968
        %1045 = vmatprep.subr.bf16.mxu0 %v965
        %1046 = vmatpush1.bf16.msra.mxu0 %v964
        %1047 = vmatprep.subr.bf16.mxu0 %v961
        %1048 = vmatpush1.bf16.msra.mxu0 %v960
        %1049 = vmatprep.subr.bf16.mxu0 %v957
        %1050 = vmatpush1.bf16.msra.mxu0 %v956
        %1051 = vmatprep.subr.bf16.mxu0 %v953
        %1052 = vmatpush1.bf16.msra.mxu0 %v952
        %1053 = vmatprep.subr.bf16.mxu0 %v949
        %1054 = vmatpush1.bf16.msra.mxu0 %v948
        %1055 = vmatprep.subr.bf16.mxu0 %v945
        %1056 = vmatpush1.bf16.msra.mxu0 %v944
        %1057 = vmatprep.subr.bf16.mxu0 %v941
        %1058 = vmatpush1.bf16.msra.mxu0 %v940
        %1059 = vmatprep.subr.bf16.mxu0 0
        %1060 = vmatpush2.bf16.msra.mxu0 0
        %1061 = vmatprep.subr.bf16.mxu0 0
        %1062 = vmatpush2.bf16.msra.mxu0 0
        %1063 = vmatprep.subr.bf16.mxu0 0
        %1064 = vmatpush2.bf16.msra.mxu0 0
        %1065 = vmatprep.subr.bf16.mxu0 0
        %1066 = vmatpush2.bf16.msra.mxu0 0
        %1067 = vmatprep.subr.bf16.mxu0 0
        %1068 = vmatpush2.bf16.msra.mxu0 0
        %1069 = vmatprep.subr.bf16.mxu0 0
        %1070 = vmatpush2.bf16.msra.mxu0 0
        %1071 = vmatprep.subr.bf16.mxu0 0
        %1072 = vmatpush2.bf16.msra.mxu0 0
        %1073 = vmatprep.subr.bf16.mxu0 0
        %1074 = vmatpush2.bf16.msra.mxu0 0
        %1075 = vmatprep.mubr.bf16.mxu0 0
        %1076 = vmatmul.mubr.bf16.gmra.mxu0 %v841
        %v1077 = vpop.f32.mrf.mxu0
        %v1078 = vadd.f32 0.0, %v1077
        %v1079 = vpop.f32.mrf.mxu0
        %v1080 = vadd.f32 0.0, %v1079
        %v1081 = vpop.f32.mrf.mxu0
        %v1082 = vpop.f32.mrf.mxu0
        %1083 = vdwg.mxu0
        %v1084 = vadd.f32 %v837, %v1037
        %v1085 = vadd.f32 %v838, %v1039
        %v1086 = vadd.f32 %v839, %v1078
        %v1087 = vadd.f32 %v840, %v1080
        %v1088 = vxor.u32 %v1084, 2147483648
        %v1089 = vxor.u32 %v1085, 2147483648
        %v1090 = vxor.u32 %v1087, 2147483648
        %v1091 = vmul.f32 %v1088, 1.442695
        %v1092 = vpow.pop %v1091
        %v1093 = vmul.f32 %v1089, 1.442695
        %v1094 = vpow.pop %v1093
        %v1095 = vmul.f32 %v1090, 1.442695
        %v1096 = vpow.pop %v1095
        %v1097 = vadd.f32 %v1092, 1.0
        %v1098 = vadd.f32 %v1094, 1.0
        %v1099 = vadd.f32 %v1096, 1.0
        %v1100 = vrcp.pop %v1097
        %v1101 = vmul.f32 1.0, %v1100
        %v1102 = vrcp.pop %v1098
        %v1103 = vmul.f32 1.0, %v1102
        %v1104 = vrcp.pop %v1099
        %v1105 = vmul.f32 1.0, %v1104
        %v1106 = vtanh.pop %v1086
        %v1107 = vmul.f32 %v1103, %v836
        %v1108 = vmul.f32 %v1101, %v1106
        %v1109 = vadd.f32 %v1107, %v1108
        %v1110 = vtanh.pop %v1109
        %v1111 = vmul.f32 %v1105, %v1110
        %1112 = vst [vmem:[%s478] sm:$0xff] %v1111
        %s1113 = scalar_lea.vmem [#allocation2], 32
        %v1114 = vld [vmem:[%s1113] sm:$0xff]
        %v1115 = vld [vmem:[%s1113 + $0x8] sm:$0xff]
        %v1116 = vld [vmem:[%s1113 + $0x10] sm:$0xff]
        %v1117 = vld [vmem:[%s1113 + $0x18] sm:$0xff]
        %v1118 = vpack.c.bf16 %v1111, %v1111
        %1119 = vmatprep.subr.bf16.mxu0 %v967
        %1120 = vmatpush1.bf16.msra.mxu0 %v966
        %1121 = vmatprep.subr.bf16.mxu0 %v963
        %1122 = vmatpush1.bf16.msra.mxu0 %v962
        %1123 = vmatprep.subr.bf16.mxu0 %v959
        %1124 = vmatpush1.bf16.msra.mxu0 %v958
        %1125 = vmatprep.subr.bf16.mxu0 %v955
        %1126 = vmatpush1.bf16.msra.mxu0 %v954
        %1127 = vmatprep.subr.bf16.mxu0 %v951
        %1128 = vmatpush1.bf16.msra.mxu0 %v950
        %1129 = vmatprep.subr.bf16.mxu0 %v947
        %1130 = vmatpush1.bf16.msra.mxu0 %v946
        %1131 = vmatprep.subr.bf16.mxu0 %v943
        %1132 = vmatpush1.bf16.msra.mxu0 %v942
        %1133 = vmatprep.subr.bf16.mxu0 %v939
        %1134 = vmatpush1.bf16.msra.mxu0 %v938
        %1135 = vmatprep.subr.bf16.mxu0 0
        %1136 = vmatpush2.bf16.msra.mxu0 0
        %1137 = vmatprep.subr.bf16.mxu0 0
        %1138 = vmatpush2.bf16.msra.mxu0 0
        %1139 = vmatprep.subr.bf16.mxu0 0
        %1140 = vmatpush2.bf16.msra.mxu0 0
        %1141 = vmatprep.subr.bf16.mxu0 0
        %1142 = vmatpush2.bf16.msra.mxu0 0
        %1143 = vmatprep.subr.bf16.mxu0 0
        %1144 = vmatpush2.bf16.msra.mxu0 0
        %1145 = vmatprep.subr.bf16.mxu0 0
        %1146 = vmatpush2.bf16.msra.mxu0 0
        %1147 = vmatprep.subr.bf16.mxu0 0
        %1148 = vmatpush2.bf16.msra.mxu0 0
        %1149 = vmatprep.subr.bf16.mxu0 0
        %1150 = vmatpush2.bf16.msra.mxu0 0
        %1151 = vmatprep.mubr.bf16.mxu0 0
        %1152 = vmatmul.mubr.bf16.gmra.mxu0 %v1118
        %v1153 = vpop.f32.mrf.mxu0
        %v1154 = vadd.f32 0.0, %v1153
        %v1155 = vpop.f32.mrf.mxu0
        %v1156 = vadd.f32 0.0, %v1155
        %v1157 = vpop.f32.mrf.mxu0
        %v1158 = vpop.f32.mrf.mxu0
        %1159 = vdwg.mxu0
        %1160 = vmatprep.subr.bf16.mxu0 %v969
        %1161 = vmatpush1.bf16.msra.mxu0 %v968
        %1162 = vmatprep.subr.bf16.mxu0 %v965
        %1163 = vmatpush1.bf16.msra.mxu0 %v964
        %1164 = vmatprep.subr.bf16.mxu0 %v961
        %1165 = vmatpush1.bf16.msra.mxu0 %v960
        %1166 = vmatprep.subr.bf16.mxu0 %v957
        %1167 = vmatpush1.bf16.msra.mxu0 %v956
        %1168 = vmatprep.subr.bf16.mxu0 %v953
        %1169 = vmatpush1.bf16.msra.mxu0 %v952
        %1170 = vmatprep.subr.bf16.mxu0 %v949
        %1171 = vmatpush1.bf16.msra.mxu0 %v948
        %1172 = vmatprep.subr.bf16.mxu0 %v945
        %1173 = vmatpush1.bf16.msra.mxu0 %v944
        %1174 = vmatprep.subr.bf16.mxu0 %v941
        %1175 = vmatpush1.bf16.msra.mxu0 %v940
        %1176 = vmatprep.subr.bf16.mxu0 0
        %1177 = vmatpush2.bf16.msra.mxu0 0
        %1178 = vmatprep.subr.bf16.mxu0 0
        %1179 = vmatpush2.bf16.msra.mxu0 0
        %1180 = vmatprep.subr.bf16.mxu0 0
        %1181 = vmatpush2.bf16.msra.mxu0 0
        %1182 = vmatprep.subr.bf16.mxu0 0
        %1183 = vmatpush2.bf16.msra.mxu0 0
        %1184 = vmatprep.subr.bf16.mxu0 0
        %1185 = vmatpush2.bf16.msra.mxu0 0
        %1186 = vmatprep.subr.bf16.mxu0 0
        %1187 = vmatpush2.bf16.msra.mxu0 0
        %1188 = vmatprep.subr.bf16.mxu0 0
        %1189 = vmatpush2.bf16.msra.mxu0 0
        %1190 = vmatprep.subr.bf16.mxu0 0
        %1191 = vmatpush2.bf16.msra.mxu0 0
        %1192 = vmatprep.mubr.bf16.mxu0 0
        %1193 = vmatmul.mubr.bf16.gmra.mxu0 %v1118
        %v1194 = vpop.f32.mrf.mxu0
        %v1195 = vadd.f32 0.0, %v1194
        %v1196 = vpop.f32.mrf.mxu0
        %v1197 = vadd.f32 0.0, %v1196
        %v1198 = vpop.f32.mrf.mxu0
        %v1199 = vpop.f32.mrf.mxu0
        %1200 = vdwg.mxu0
        %v1201 = vadd.f32 %v1114, %v1154
        %v1202 = vadd.f32 %v1115, %v1156
        %v1203 = vadd.f32 %v1116, %v1195
        %v1204 = vadd.f32 %v1117, %v1197
        %v1205 = vxor.u32 %v1201, 2147483648
        %v1206 = vxor.u32 %v1202, 2147483648
        %v1207 = vxor.u32 %v1204, 2147483648
        %v1208 = vmul.f32 %v1205, 1.442695
        %v1209 = vpow.pop %v1208
        %v1210 = vmul.f32 %v1206, 1.442695
        %v1211 = vpow.pop %v1210
        %v1212 = vmul.f32 %v1207, 1.442695
        %v1213 = vpow.pop %v1212
        %v1214 = vadd.f32 %v1209, 1.0
        %v1215 = vadd.f32 %v1211, 1.0
        %v1216 = vadd.f32 %v1213, 1.0
        %v1217 = vrcp.pop %v1214
        %v1218 = vmul.f32 1.0, %v1217
        %v1219 = vrcp.pop %v1215
        %v1220 = vmul.f32 1.0, %v1219
        %v1221 = vrcp.pop %v1216
        %v1222 = vmul.f32 1.0, %v1221
        %v1223 = vtanh.pop %v1203
        %v1224 = vmul.f32 %v1220, %v1109
        %v1225 = vmul.f32 %v1218, %v1223
        %v1226 = vadd.f32 %v1224, %v1225
        %v1227 = vtanh.pop %v1226
        %v1228 = vmul.f32 %v1222, %v1227
        %s1229 = scalar_lea.vmem %s478, 8 [#allocation4]
        %1230 = vst [vmem:[%s1229] sm:$0xff] %v1228
        %s1231 = scalar_lea.vmem [#allocation2], 64
        %v1232 = vld [vmem:[%s1231] sm:$0xff]
        %v1233 = vld [vmem:[%s1231 + $0x8] sm:$0xff]
        %v1234 = vld [vmem:[%s1231 + $0x10] sm:$0xff]
        %v1235 = vld [vmem:[%s1231 + $0x18] sm:$0xff]
        %v1236 = vpack.c.bf16 %v1228, %v1228
        %1237 = vmatprep.subr.bf16.mxu0 %v967
        %1238 = vmatpush1.bf16.msra.mxu0 %v966
        %1239 = vmatprep.subr.bf16.mxu0 %v963
        %1240 = vmatpush1.bf16.msra.mxu0 %v962
        %1241 = vmatprep.subr.bf16.mxu0 %v959
        %1242 = vmatpush1.bf16.msra.mxu0 %v958
        %1243 = vmatprep.subr.bf16.mxu0 %v955
        %1244 = vmatpush1.bf16.msra.mxu0 %v954
        %1245 = vmatprep.subr.bf16.mxu0 %v951
        %1246 = vmatpush1.bf16.msra.mxu0 %v950
        %1247 = vmatprep.subr.bf16.mxu0 %v947
        %1248 = vmatpush1.bf16.msra.mxu0 %v946
        %1249 = vmatprep.subr.bf16.mxu0 %v943
        %1250 = vmatpush1.bf16.msra.mxu0 %v942
        %1251 = vmatprep.subr.bf16.mxu0 %v939
        %1252 = vmatpush1.bf16.msra.mxu0 %v938
        %1253 = vmatprep.subr.bf16.mxu0 0
        %1254 = vmatpush2.bf16.msra.mxu0 0
        %1255 = vmatprep.subr.bf16.mxu0 0
        %1256 = vmatpush2.bf16.msra.mxu0 0
        %1257 = vmatprep.subr.bf16.mxu0 0
        %1258 = vmatpush2.bf16.msra.mxu0 0
        %1259 = vmatprep.subr.bf16.mxu0 0
        %1260 = vmatpush2.bf16.msra.mxu0 0
        %1261 = vmatprep.subr.bf16.mxu0 0
        %1262 = vmatpush2.bf16.msra.mxu0 0
        %1263 = vmatprep.subr.bf16.mxu0 0
        %1264 = vmatpush2.bf16.msra.mxu0 0
        %1265 = vmatprep.subr.bf16.mxu0 0
        %1266 = vmatpush2.bf16.msra.mxu0 0
        %1267 = vmatprep.subr.bf16.mxu0 0
        %1268 = vmatpush2.bf16.msra.mxu0 0
        %1269 = vmatprep.mubr.bf16.mxu0 0
        %1270 = vmatmul.mubr.bf16.gmra.mxu0 %v1236
        %v1271 = vpop.f32.mrf.mxu0
        %v1272 = vadd.f32 0.0, %v1271
        %v1273 = vpop.f32.mrf.mxu0
        %v1274 = vadd.f32 0.0, %v1273
        %v1275 = vpop.f32.mrf.mxu0
        %v1276 = vpop.f32.mrf.mxu0
        %1277 = vdwg.mxu0
        %1278 = vmatprep.subr.bf16.mxu0 %v969
        %1279 = vmatpush1.bf16.msra.mxu0 %v968
        %1280 = vmatprep.subr.bf16.mxu0 %v965
        %1281 = vmatpush1.bf16.msra.mxu0 %v964
        %1282 = vmatprep.subr.bf16.mxu0 %v961
        %1283 = vmatpush1.bf16.msra.mxu0 %v960
        %1284 = vmatprep.subr.bf16.mxu0 %v957
        %1285 = vmatpush1.bf16.msra.mxu0 %v956
        %1286 = vmatprep.subr.bf16.mxu0 %v953
        %1287 = vmatpush1.bf16.msra.mxu0 %v952
        %1288 = vmatprep.subr.bf16.mxu0 %v949
        %1289 = vmatpush1.bf16.msra.mxu0 %v948
        %1290 = vmatprep.subr.bf16.mxu0 %v945
        %1291 = vmatpush1.bf16.msra.mxu0 %v944
        %1292 = vmatprep.subr.bf16.mxu0 %v941
        %1293 = vmatpush1.bf16.msra.mxu0 %v940
        %1294 = vmatprep.subr.bf16.mxu0 0
        %1295 = vmatpush2.bf16.msra.mxu0 0
        %1296 = vmatprep.subr.bf16.mxu0 0
        %1297 = vmatpush2.bf16.msra.mxu0 0
        %1298 = vmatprep.subr.bf16.mxu0 0
        %1299 = vmatpush2.bf16.msra.mxu0 0
        %1300 = vmatprep.subr.bf16.mxu0 0
        %1301 = vmatpush2.bf16.msra.mxu0 0
        %1302 = vmatprep.subr.bf16.mxu0 0
        %1303 = vmatpush2.bf16.msra.mxu0 0
        %1304 = vmatprep.subr.bf16.mxu0 0
        %1305 = vmatpush2.bf16.msra.mxu0 0
        %1306 = vmatprep.subr.bf16.mxu0 0
        %1307 = vmatpush2.bf16.msra.mxu0 0
        %1308 = vmatprep.subr.bf16.mxu0 0
        %1309 = vmatpush2.bf16.msra.mxu0 0
        %1310 = vmatprep.mubr.bf16.mxu0 0
        %1311 = vmatmul.mubr.bf16.gmra.mxu0 %v1236
        %v1312 = vpop.f32.mrf.mxu0
        %v1313 = vadd.f32 0.0, %v1312
        %v1314 = vpop.f32.mrf.mxu0
        %v1315 = vadd.f32 0.0, %v1314
        %v1316 = vpop.f32.mrf.mxu0
        %v1317 = vpop.f32.mrf.mxu0
        %1318 = vdwg.mxu0
        %v1319 = vadd.f32 %v1232, %v1272
        %v1320 = vadd.f32 %v1233, %v1274
        %v1321 = vadd.f32 %v1234, %v1313
        %v1322 = vadd.f32 %v1235, %v1315
        %v1323 = vxor.u32 %v1319, 2147483648
        %v1324 = vxor.u32 %v1320, 2147483648
        %v1325 = vxor.u32 %v1322, 2147483648
        %v1326 = vmul.f32 %v1323, 1.442695
        %v1327 = vpow.pop %v1326
        %v1328 = vmul.f32 %v1324, 1.442695
        %v1329 = vpow.pop %v1328
        %v1330 = vmul.f32 %v1325, 1.442695
        %v1331 = vpow.pop %v1330
        %v1332 = vadd.f32 %v1327, 1.0
        %v1333 = vadd.f32 %v1329, 1.0
        %v1334 = vadd.f32 %v1331, 1.0
        %v1335 = vrcp.pop %v1332
        %v1336 = vmul.f32 1.0, %v1335
        %v1337 = vrcp.pop %v1333
        %v1338 = vmul.f32 1.0, %v1337
        %v1339 = vrcp.pop %v1334
        %v1340 = vmul.f32 1.0, %v1339
        %v1341 = vtanh.pop %v1321
        %v1342 = vmul.f32 %v1338, %v1226
        %v1343 = vmul.f32 %v1336, %v1341
        %v1344 = vadd.f32 %v1342, %v1343
        %v1345 = vtanh.pop %v1344
        %v1346 = vmul.f32 %v1340, %v1345
        %s1347 = scalar_lea.vmem %s478, 16 [#allocation4]
        %1348 = vst [vmem:[%s1347] sm:$0xff] %v1346
        %s1349 = scalar_lea.vmem [#allocation2], 96
        %v1350 = vld [vmem:[%s1349] sm:$0xff]
        %v1351 = vld [vmem:[%s1349 + $0x8] sm:$0xff]
        %v1352 = vld [vmem:[%s1349 + $0x10] sm:$0xff]
        %v1353 = vld [vmem:[%s1349 + $0x18] sm:$0xff]
        %v1354 = vpack.c.bf16 %v1346, %v1346
        %1355 = vmatprep.subr.bf16.mxu0 %v967
        %1356 = vmatpush1.bf16.msra.mxu0 %v966
        %1357 = vmatprep.subr.bf16.mxu0 %v963
        %1358 = vmatpush1.bf16.msra.mxu0 %v962
        %1359 = vmatprep.subr.bf16.mxu0 %v959
        %1360 = vmatpush1.bf16.msra.mxu0 %v958
        %1361 = vmatprep.subr.bf16.mxu0 %v955
        %1362 = vmatpush1.bf16.msra.mxu0 %v954
        %1363 = vmatprep.subr.bf16.mxu0 %v951
        %1364 = vmatpush1.bf16.msra.mxu0 %v950
        %1365 = vmatprep.subr.bf16.mxu0 %v947
        %1366 = vmatpush1.bf16.msra.mxu0 %v946
        %1367 = vmatprep.subr.bf16.mxu0 %v943
        %1368 = vmatpush1.bf16.msra.mxu0 %v942
        %1369 = vmatprep.subr.bf16.mxu0 %v939
        %1370 = vmatpush1.bf16.msra.mxu0 %v938
        %1371 = vmatprep.subr.bf16.mxu0 0
        %1372 = vmatpush2.bf16.msra.mxu0 0
        %1373 = vmatprep.subr.bf16.mxu0 0
        %1374 = vmatpush2.bf16.msra.mxu0 0
        %1375 = vmatprep.subr.bf16.mxu0 0
        %1376 = vmatpush2.bf16.msra.mxu0 0
        %1377 = vmatprep.subr.bf16.mxu0 0
        %1378 = vmatpush2.bf16.msra.mxu0 0
        %1379 = vmatprep.subr.bf16.mxu0 0
        %1380 = vmatpush2.bf16.msra.mxu0 0
        %1381 = vmatprep.subr.bf16.mxu0 0
        %1382 = vmatpush2.bf16.msra.mxu0 0
        %1383 = vmatprep.subr.bf16.mxu0 0
        %1384 = vmatpush2.bf16.msra.mxu0 0
        %1385 = vmatprep.subr.bf16.mxu0 0
        %1386 = vmatpush2.bf16.msra.mxu0 0
        %1387 = vmatprep.mubr.bf16.mxu0 0
        %1388 = vmatmul.mubr.bf16.gmra.mxu0 %v1354
        %v1389 = vpop.f32.mrf.mxu0
        %v1390 = vadd.f32 0.0, %v1389
        %v1391 = vpop.f32.mrf.mxu0
        %v1392 = vadd.f32 0.0, %v1391
        %v1393 = vpop.f32.mrf.mxu0
        %v1394 = vpop.f32.mrf.mxu0
        %1395 = vdwg.mxu0
        %1396 = vmatprep.subr.bf16.mxu0 %v969
        %1397 = vmatpush1.bf16.msra.mxu0 %v968
        %1398 = vmatprep.subr.bf16.mxu0 %v965
        %1399 = vmatpush1.bf16.msra.mxu0 %v964
        %1400 = vmatprep.subr.bf16.mxu0 %v961
        %1401 = vmatpush1.bf16.msra.mxu0 %v960
        %1402 = vmatprep.subr.bf16.mxu0 %v957
        %1403 = vmatpush1.bf16.msra.mxu0 %v956
        %1404 = vmatprep.subr.bf16.mxu0 %v953
        %1405 = vmatpush1.bf16.msra.mxu0 %v952
        %1406 = vmatprep.subr.bf16.mxu0 %v949
        %1407 = vmatpush1.bf16.msra.mxu0 %v948
        %1408 = vmatprep.subr.bf16.mxu0 %v945
        %1409 = vmatpush1.bf16.msra.mxu0 %v944
        %1410 = vmatprep.subr.bf16.mxu0 %v941
        %1411 = vmatpush1.bf16.msra.mxu0 %v940
        %1412 = vmatprep.subr.bf16.mxu0 0
        %1413 = vmatpush2.bf16.msra.mxu0 0
        %1414 = vmatprep.subr.bf16.mxu0 0
        %1415 = vmatpush2.bf16.msra.mxu0 0
        %1416 = vmatprep.subr.bf16.mxu0 0
        %1417 = vmatpush2.bf16.msra.mxu0 0
        %1418 = vmatprep.subr.bf16.mxu0 0
        %1419 = vmatpush2.bf16.msra.mxu0 0
        %1420 = vmatprep.subr.bf16.mxu0 0
        %1421 = vmatpush2.bf16.msra.mxu0 0
        %1422 = vmatprep.subr.bf16.mxu0 0
        %1423 = vmatpush2.bf16.msra.mxu0 0
        %1424 = vmatprep.subr.bf16.mxu0 0
        %1425 = vmatpush2.bf16.msra.mxu0 0
        %1426 = vmatprep.subr.bf16.mxu0 0
        %1427 = vmatpush2.bf16.msra.mxu0 0
        %1428 = vmatprep.mubr.bf16.mxu0 0
        %1429 = vmatmul.mubr.bf16.gmra.mxu0 %v1354
        %v1430 = vpop.f32.mrf.mxu0
        %v1431 = vadd.f32 0.0, %v1430
        %v1432 = vpop.f32.mrf.mxu0
        %v1433 = vadd.f32 0.0, %v1432
        %v1434 = vpop.f32.mrf.mxu0
        %v1435 = vpop.f32.mrf.mxu0
        %1436 = vdwg.mxu0
        %v1437 = vadd.f32 %v1350, %v1390
        %v1438 = vadd.f32 %v1351, %v1392
        %v1439 = vadd.f32 %v1352, %v1431
        %v1440 = vadd.f32 %v1353, %v1433
        %v1441 = vxor.u32 %v1437, 2147483648
        %v1442 = vxor.u32 %v1438, 2147483648
        %v1443 = vxor.u32 %v1440, 2147483648
        %v1444 = vmul.f32 %v1441, 1.442695
        %v1445 = vpow.pop %v1444
        %v1446 = vmul.f32 %v1442, 1.442695
        %v1447 = vpow.pop %v1446
        %v1448 = vmul.f32 %v1443, 1.442695
        %v1449 = vpow.pop %v1448
        %v1450 = vadd.f32 %v1445, 1.0
        %v1451 = vadd.f32 %v1447, 1.0
        %v1452 = vadd.f32 %v1449, 1.0
        %v1453 = vrcp.pop %v1450
        %v1454 = vmul.f32 1.0, %v1453
        %v1455 = vrcp.pop %v1451
        %v1456 = vmul.f32 1.0, %v1455
        %v1457 = vrcp.pop %v1452
        %v1458 = vmul.f32 1.0, %v1457
        %v1459 = vtanh.pop %v1439
        %v1460 = vmul.f32 %v1456, %v1344
        %v1461 = vmul.f32 %v1454, %v1459
        %v1462 = vadd.f32 %v1460, %v1461
        %v1463 = vtanh.pop %v1462
        %v1464 = vmul.f32 %v1458, %v1463
        %s1465 = scalar_lea.vmem %s478, 24 [#allocation4]
        %1466 = vst [vmem:[%s1465] sm:$0xff] %v1464
        %s1467 = scalar_lea.vmem [#allocation2], 128
        %v1468 = vld [vmem:[%s1467] sm:$0xff]
        %v1469 = vld [vmem:[%s1467 + $0x8] sm:$0xff]
        %v1470 = vld [vmem:[%s1467 + $0x10] sm:$0xff]
        %v1471 = vld [vmem:[%s1467 + $0x18] sm:$0xff]
        %v1472 = vpack.c.bf16 %v1464, %v1464
        %1473 = vmatprep.subr.bf16.mxu0 %v967
        %1474 = vmatpush1.bf16.msra.mxu0 %v966
        %1475 = vmatprep.subr.bf16.mxu0 %v963
        %1476 = vmatpush1.bf16.msra.mxu0 %v962
        %1477 = vmatprep.subr.bf16.mxu0 %v959
        %1478 = vmatpush1.bf16.msra.mxu0 %v958
        %1479 = vmatprep.subr.bf16.mxu0 %v955
        %1480 = vmatpush1.bf16.msra.mxu0 %v954
        %1481 = vmatprep.subr.bf16.mxu0 %v951
        %1482 = vmatpush1.bf16.msra.mxu0 %v950
        %1483 = vmatprep.subr.bf16.mxu0 %v947
        %1484 = vmatpush1.bf16.msra.mxu0 %v946
        %1485 = vmatprep.subr.bf16.mxu0 %v943
        %1486 = vmatpush1.bf16.msra.mxu0 %v942
        %1487 = vmatprep.subr.bf16.mxu0 %v939
        %1488 = vmatpush1.bf16.msra.mxu0 %v938
        %1489 = vmatprep.subr.bf16.mxu0 0
        %1490 = vmatpush2.bf16.msra.mxu0 0
        %1491 = vmatprep.subr.bf16.mxu0 0
        %1492 = vmatpush2.bf16.msra.mxu0 0
        %1493 = vmatprep.subr.bf16.mxu0 0
        %1494 = vmatpush2.bf16.msra.mxu0 0
        %1495 = vmatprep.subr.bf16.mxu0 0
        %1496 = vmatpush2.bf16.msra.mxu0 0
        %1497 = vmatprep.subr.bf16.mxu0 0
        %1498 = vmatpush2.bf16.msra.mxu0 0
        %1499 = vmatprep.subr.bf16.mxu0 0
        %1500 = vmatpush2.bf16.msra.mxu0 0
        %1501 = vmatprep.subr.bf16.mxu0 0
        %1502 = vmatpush2.bf16.msra.mxu0 0
        %1503 = vmatprep.subr.bf16.mxu0 0
        %1504 = vmatpush2.bf16.msra.mxu0 0
        %1505 = vmatprep.mubr.bf16.mxu0 0
        %1506 = vmatmul.mubr.bf16.gmra.mxu0 %v1472
        %v1507 = vpop.f32.mrf.mxu0
        %v1508 = vadd.f32 0.0, %v1507
        %v1509 = vpop.f32.mrf.mxu0
        %v1510 = vadd.f32 0.0, %v1509
        %v1511 = vpop.f32.mrf.mxu0
        %v1512 = vpop.f32.mrf.mxu0
        %1513 = vdwg.mxu0
        %1514 = vmatprep.subr.bf16.mxu0 %v969
        %1515 = vmatpush1.bf16.msra.mxu0 %v968
        %1516 = vmatprep.subr.bf16.mxu0 %v965
        %1517 = vmatpush1.bf16.msra.mxu0 %v964
        %1518 = vmatprep.subr.bf16.mxu0 %v961
        %1519 = vmatpush1.bf16.msra.mxu0 %v960
        %1520 = vmatprep.subr.bf16.mxu0 %v957
        %1521 = vmatpush1.bf16.msra.mxu0 %v956
        %1522 = vmatprep.subr.bf16.mxu0 %v953
        %1523 = vmatpush1.bf16.msra.mxu0 %v952
        %1524 = vmatprep.subr.bf16.mxu0 %v949
        %1525 = vmatpush1.bf16.msra.mxu0 %v948
        %1526 = vmatprep.subr.bf16.mxu0 %v945
        %1527 = vmatpush1.bf16.msra.mxu0 %v944
        %1528 = vmatprep.subr.bf16.mxu0 %v941
        %1529 = vmatpush1.bf16.msra.mxu0 %v940
        %1530 = vmatprep.subr.bf16.mxu0 0
        %1531 = vmatpush2.bf16.msra.mxu0 0
        %1532 = vmatprep.subr.bf16.mxu0 0
        %1533 = vmatpush2.bf16.msra.mxu0 0
        %1534 = vmatprep.subr.bf16.mxu0 0
        %1535 = vmatpush2.bf16.msra.mxu0 0
        %1536 = vmatprep.subr.bf16.mxu0 0
        %1537 = vmatpush2.bf16.msra.mxu0 0
        %1538 = vmatprep.subr.bf16.mxu0 0
        %1539 = vmatpush2.bf16.msra.mxu0 0
        %1540 = vmatprep.subr.bf16.mxu0 0
        %1541 = vmatpush2.bf16.msra.mxu0 0
        %1542 = vmatprep.subr.bf16.mxu0 0
        %1543 = vmatpush2.bf16.msra.mxu0 0
        %1544 = vmatprep.subr.bf16.mxu0 0
        %1545 = vmatpush2.bf16.msra.mxu0 0
        %1546 = vmatprep.mubr.bf16.mxu0 0
        %1547 = vmatmul.mubr.bf16.gmra.mxu0 %v1472
        %v1548 = vpop.f32.mrf.mxu0
        %v1549 = vadd.f32 0.0, %v1548
        %v1550 = vpop.f32.mrf.mxu0
        %v1551 = vadd.f32 0.0, %v1550
        %v1552 = vpop.f32.mrf.mxu0
        %v1553 = vpop.f32.mrf.mxu0
        %1554 = vdwg.mxu0
        %v1555 = vadd.f32 %v1468, %v1508
        %v1556 = vadd.f32 %v1469, %v1510
        %v1557 = vadd.f32 %v1470, %v1549
        %v1558 = vadd.f32 %v1471, %v1551
        %v1559 = vxor.u32 %v1555, 2147483648
        %v1560 = vxor.u32 %v1556, 2147483648
        %v1561 = vxor.u32 %v1558, 2147483648
        %v1562 = vmul.f32 %v1559, 1.442695
        %v1563 = vpow.pop %v1562
        %v1564 = vmul.f32 %v1560, 1.442695
        %v1565 = vpow.pop %v1564
        %v1566 = vmul.f32 %v1561, 1.442695
        %v1567 = vpow.pop %v1566
        %v1568 = vadd.f32 %v1563, 1.0
        %v1569 = vadd.f32 %v1565, 1.0
        %v1570 = vadd.f32 %v1567, 1.0
        %v1571 = vrcp.pop %v1568
        %v1572 = vmul.f32 1.0, %v1571
        %v1573 = vrcp.pop %v1569
        %v1574 = vmul.f32 1.0, %v1573
        %v1575 = vrcp.pop %v1570
        %v1576 = vmul.f32 1.0, %v1575
        %v1577 = vtanh.pop %v1557
        %v1578 = vmul.f32 %v1574, %v1462
        %v1579 = vmul.f32 %v1572, %v1577
        %v1580 = vadd.f32 %v1578, %v1579
        %v1581 = vtanh.pop %v1580
        %v1582 = vmul.f32 %v1576, %v1581
        %s1583 = scalar_lea.vmem %s478, 32 [#allocation4]
        %1584 = vst [vmem:[%s1583] sm:$0xff] %v1582
        %s1585 = scalar_lea.vmem [#allocation2], 160
        %v1586 = vld [vmem:[%s1585] sm:$0xff]
        %v1587 = vld [vmem:[%s1585 + $0x8] sm:$0xff]
        %v1588 = vld [vmem:[%s1585 + $0x10] sm:$0xff]
        %v1589 = vld [vmem:[%s1585 + $0x18] sm:$0xff]
        %v1590 = vpack.c.bf16 %v1582, %v1582
        %1591 = vmatprep.subr.bf16.mxu0 %v967
        %1592 = vmatpush1.bf16.msra.mxu0 %v966
        %1593 = vmatprep.subr.bf16.mxu0 %v963
        %1594 = vmatpush1.bf16.msra.mxu0 %v962
        %1595 = vmatprep.subr.bf16.mxu0 %v959
        %1596 = vmatpush1.bf16.msra.mxu0 %v958
        %1597 = vmatprep.subr.bf16.mxu0 %v955
        %1598 = vmatpush1.bf16.msra.mxu0 %v954
        %1599 = vmatprep.subr.bf16.mxu0 %v951
        %1600 = vmatpush1.bf16.msra.mxu0 %v950
        %1601 = vmatprep.subr.bf16.mxu0 %v947
        %1602 = vmatpush1.bf16.msra.mxu0 %v946
        %1603 = vmatprep.subr.bf16.mxu0 %v943
        %1604 = vmatpush1.bf16.msra.mxu0 %v942
        %1605 = vmatprep.subr.bf16.mxu0 %v939
        %1606 = vmatpush1.bf16.msra.mxu0 %v938
        %1607 = vmatprep.subr.bf16.mxu0 0
        %1608 = vmatpush2.bf16.msra.mxu0 0
        %1609 = vmatprep.subr.bf16.mxu0 0
        %1610 = vmatpush2.bf16.msra.mxu0 0
        %1611 = vmatprep.subr.bf16.mxu0 0
        %1612 = vmatpush2.bf16.msra.mxu0 0
        %1613 = vmatprep.subr.bf16.mxu0 0
        %1614 = vmatpush2.bf16.msra.mxu0 0
        %1615 = vmatprep.subr.bf16.mxu0 0
        %1616 = vmatpush2.bf16.msra.mxu0 0
        %1617 = vmatprep.subr.bf16.mxu0 0
        %1618 = vmatpush2.bf16.msra.mxu0 0
        %1619 = vmatprep.subr.bf16.mxu0 0
        %1620 = vmatpush2.bf16.msra.mxu0 0
        %1621 = vmatprep.subr.bf16.mxu0 0
        %1622 = vmatpush2.bf16.msra.mxu0 0
        %1623 = vmatprep.mubr.bf16.mxu0 0
        %1624 = vmatmul.mubr.bf16.gmra.mxu0 %v1590
        %v1625 = vpop.f32.mrf.mxu0
        %v1626 = vadd.f32 0.0, %v1625
        %v1627 = vpop.f32.mrf.mxu0
        %v1628 = vadd.f32 0.0, %v1627
        %v1629 = vpop.f32.mrf.mxu0
        %v1630 = vpop.f32.mrf.mxu0
        %1631 = vdwg.mxu0
        %1632 = vmatprep.subr.bf16.mxu0 %v969
        %1633 = vmatpush1.bf16.msra.mxu0 %v968
        %1634 = vmatprep.subr.bf16.mxu0 %v965
        %1635 = vmatpush1.bf16.msra.mxu0 %v964
        %1636 = vmatprep.subr.bf16.mxu0 %v961
        %1637 = vmatpush1.bf16.msra.mxu0 %v960
        %1638 = vmatprep.subr.bf16.mxu0 %v957
        %1639 = vmatpush1.bf16.msra.mxu0 %v956
        %1640 = vmatprep.subr.bf16.mxu0 %v953
        %1641 = vmatpush1.bf16.msra.mxu0 %v952
        %1642 = vmatprep.subr.bf16.mxu0 %v949
        %1643 = vmatpush1.bf16.msra.mxu0 %v948
        %1644 = vmatprep.subr.bf16.mxu0 %v945
        %1645 = vmatpush1.bf16.msra.mxu0 %v944
        %1646 = vmatprep.subr.bf16.mxu0 %v941
        %1647 = vmatpush1.bf16.msra.mxu0 %v940
        %1648 = vmatprep.subr.bf16.mxu0 0
        %1649 = vmatpush2.bf16.msra.mxu0 0
        %1650 = vmatprep.subr.bf16.mxu0 0
        %1651 = vmatpush2.bf16.msra.mxu0 0
        %1652 = vmatprep.subr.bf16.mxu0 0
        %1653 = vmatpush2.bf16.msra.mxu0 0
        %1654 = vmatprep.subr.bf16.mxu0 0
        %1655 = vmatpush2.bf16.msra.mxu0 0
        %1656 = vmatprep.subr.bf16.mxu0 0
        %1657 = vmatpush2.bf16.msra.mxu0 0
        %1658 = vmatprep.subr.bf16.mxu0 0
        %1659 = vmatpush2.bf16.msra.mxu0 0
        %1660 = vmatprep.subr.bf16.mxu0 0
        %1661 = vmatpush2.bf16.msra.mxu0 0
        %1662 = vmatprep.subr.bf16.mxu0 0
        %1663 = vmatpush2.bf16.msra.mxu0 0
        %1664 = vmatprep.mubr.bf16.mxu0 0
        %1665 = vmatmul.mubr.bf16.gmra.mxu0 %v1590
        %v1666 = vpop.f32.mrf.mxu0
        %v1667 = vadd.f32 0.0, %v1666
        %v1668 = vpop.f32.mrf.mxu0
        %v1669 = vadd.f32 0.0, %v1668
        %v1670 = vpop.f32.mrf.mxu0
        %v1671 = vpop.f32.mrf.mxu0
        %1672 = vdwg.mxu0
        %v1673 = vadd.f32 %v1586, %v1626
        %v1674 = vadd.f32 %v1587, %v1628
        %v1675 = vadd.f32 %v1588, %v1667
        %v1676 = vadd.f32 %v1589, %v1669
        %v1677 = vxor.u32 %v1673, 2147483648
        %v1678 = vxor.u32 %v1674, 2147483648
        %v1679 = vxor.u32 %v1676, 2147483648
        %v1680 = vmul.f32 %v1677, 1.442695
        %v1681 = vpow.pop %v1680
        %v1682 = vmul.f32 %v1678, 1.442695
        %v1683 = vpow.pop %v1682
        %v1684 = vmul.f32 %v1679, 1.442695
        %v1685 = vpow.pop %v1684
        %v1686 = vadd.f32 %v1681, 1.0
        %v1687 = vadd.f32 %v1683, 1.0
        %v1688 = vadd.f32 %v1685, 1.0
        %v1689 = vrcp.pop %v1686
        %v1690 = vmul.f32 1.0, %v1689
        %v1691 = vrcp.pop %v1687
        %v1692 = vmul.f32 1.0, %v1691
        %v1693 = vrcp.pop %v1688
        %v1694 = vmul.f32 1.0, %v1693
        %v1695 = vtanh.pop %v1675
        %v1696 = vmul.f32 %v1692, %v1580
        %v1697 = vmul.f32 %v1690, %v1695
        %v1698 = vadd.f32 %v1696, %v1697
        %v1699 = vtanh.pop %v1698
        %v1700 = vmul.f32 %v1694, %v1699
        %s1701 = scalar_lea.vmem %s478, 40 [#allocation4]
        %1702 = vst [vmem:[%s1701] sm:$0xff] %v1700
        %s1703 = scalar_lea.vmem [#allocation2], 192
        %v1704 = vld [vmem:[%s1703] sm:$0xff]
        %v1705 = vld [vmem:[%s1703 + $0x8] sm:$0xff]
        %v1706 = vld [vmem:[%s1703 + $0x10] sm:$0xff]
        %v1707 = vld [vmem:[%s1703 + $0x18] sm:$0xff]
        %v1708 = vpack.c.bf16 %v1700, %v1700
        %1709 = vmatprep.subr.bf16.mxu0 %v967
        %1710 = vmatpush1.bf16.msra.mxu0 %v966
        %1711 = vmatprep.subr.bf16.mxu0 %v963
        %1712 = vmatpush1.bf16.msra.mxu0 %v962
        %1713 = vmatprep.subr.bf16.mxu0 %v959
        %1714 = vmatpush1.bf16.msra.mxu0 %v958
        %1715 = vmatprep.subr.bf16.mxu0 %v955
        %1716 = vmatpush1.bf16.msra.mxu0 %v954
        %1717 = vmatprep.subr.bf16.mxu0 %v951
        %1718 = vmatpush1.bf16.msra.mxu0 %v950
        %1719 = vmatprep.subr.bf16.mxu0 %v947
        %1720 = vmatpush1.bf16.msra.mxu0 %v946
        %1721 = vmatprep.subr.bf16.mxu0 %v943
        %1722 = vmatpush1.bf16.msra.mxu0 %v942
        %1723 = vmatprep.subr.bf16.mxu0 %v939
        %1724 = vmatpush1.bf16.msra.mxu0 %v938
        %1725 = vmatprep.subr.bf16.mxu0 0
        %1726 = vmatpush2.bf16.msra.mxu0 0
        %1727 = vmatprep.subr.bf16.mxu0 0
        %1728 = vmatpush2.bf16.msra.mxu0 0
        %1729 = vmatprep.subr.bf16.mxu0 0
        %1730 = vmatpush2.bf16.msra.mxu0 0
        %1731 = vmatprep.subr.bf16.mxu0 0
        %1732 = vmatpush2.bf16.msra.mxu0 0
        %1733 = vmatprep.subr.bf16.mxu0 0
        %1734 = vmatpush2.bf16.msra.mxu0 0
        %1735 = vmatprep.subr.bf16.mxu0 0
        %1736 = vmatpush2.bf16.msra.mxu0 0
        %1737 = vmatprep.subr.bf16.mxu0 0
        %1738 = vmatpush2.bf16.msra.mxu0 0
        %1739 = vmatprep.subr.bf16.mxu0 0
        %1740 = vmatpush2.bf16.msra.mxu0 0
        %1741 = vmatprep.mubr.bf16.mxu0 0
        %1742 = vmatmul.mubr.bf16.gmra.mxu0 %v1708
        %v1743 = vpop.f32.mrf.mxu0
        %v1744 = vadd.f32 0.0, %v1743
        %v1745 = vpop.f32.mrf.mxu0
        %v1746 = vadd.f32 0.0, %v1745
        %v1747 = vpop.f32.mrf.mxu0
        %v1748 = vpop.f32.mrf.mxu0
        %1749 = vdwg.mxu0
        %1750 = vmatprep.subr.bf16.mxu0 %v969
        %1751 = vmatpush1.bf16.msra.mxu0 %v968
        %1752 = vmatprep.subr.bf16.mxu0 %v965
        %1753 = vmatpush1.bf16.msra.mxu0 %v964
        %1754 = vmatprep.subr.bf16.mxu0 %v961
        %1755 = vmatpush1.bf16.msra.mxu0 %v960
        %1756 = vmatprep.subr.bf16.mxu0 %v957
        %1757 = vmatpush1.bf16.msra.mxu0 %v956
        %1758 = vmatprep.subr.bf16.mxu0 %v953
        %1759 = vmatpush1.bf16.msra.mxu0 %v952
        %1760 = vmatprep.subr.bf16.mxu0 %v949
        %1761 = vmatpush1.bf16.msra.mxu0 %v948
        %1762 = vmatprep.subr.bf16.mxu0 %v945
        %1763 = vmatpush1.bf16.msra.mxu0 %v944
        %1764 = vmatprep.subr.bf16.mxu0 %v941
        %1765 = vmatpush1.bf16.msra.mxu0 %v940
        %1766 = vmatprep.subr.bf16.mxu0 0
        %1767 = vmatpush2.bf16.msra.mxu0 0
        %1768 = vmatprep.subr.bf16.mxu0 0
        %1769 = vmatpush2.bf16.msra.mxu0 0
        %1770 = vmatprep.subr.bf16.mxu0 0
        %1771 = vmatpush2.bf16.msra.mxu0 0
        %1772 = vmatprep.subr.bf16.mxu0 0
        %1773 = vmatpush2.bf16.msra.mxu0 0
        %1774 = vmatprep.subr.bf16.mxu0 0
        %1775 = vmatpush2.bf16.msra.mxu0 0
        %1776 = vmatprep.subr.bf16.mxu0 0
        %1777 = vmatpush2.bf16.msra.mxu0 0
        %1778 = vmatprep.subr.bf16.mxu0 0
        %1779 = vmatpush2.bf16.msra.mxu0 0
        %1780 = vmatprep.subr.bf16.mxu0 0
        %1781 = vmatpush2.bf16.msra.mxu0 0
        %1782 = vmatprep.mubr.bf16.mxu0 0
        %1783 = vmatmul.mubr.bf16.gmra.mxu0 %v1708
        %v1784 = vpop.f32.mrf.mxu0
        %v1785 = vadd.f32 0.0, %v1784
        %v1786 = vpop.f32.mrf.mxu0
        %v1787 = vadd.f32 0.0, %v1786
        %v1788 = vpop.f32.mrf.mxu0
        %v1789 = vpop.f32.mrf.mxu0
        %1790 = vdwg.mxu0
        %v1791 = vadd.f32 %v1704, %v1744
        %v1792 = vadd.f32 %v1705, %v1746
        %v1793 = vadd.f32 %v1706, %v1785
        %v1794 = vadd.f32 %v1707, %v1787
        %v1795 = vxor.u32 %v1791, 2147483648
        %v1796 = vxor.u32 %v1792, 2147483648
        %v1797 = vxor.u32 %v1794, 2147483648
        %v1798 = vmul.f32 %v1795, 1.442695
        %v1799 = vpow.pop %v1798
        %v1800 = vmul.f32 %v1796, 1.442695
        %v1801 = vpow.pop %v1800
        %v1802 = vmul.f32 %v1797, 1.442695
        %v1803 = vpow.pop %v1802
        %v1804 = vadd.f32 %v1799, 1.0
        %v1805 = vadd.f32 %v1801, 1.0
        %v1806 = vadd.f32 %v1803, 1.0
        %v1807 = vrcp.pop %v1804
        %v1808 = vmul.f32 1.0, %v1807
        %v1809 = vrcp.pop %v1805
        %v1810 = vmul.f32 1.0, %v1809
        %v1811 = vrcp.pop %v1806
        %v1812 = vmul.f32 1.0, %v1811
        %v1813 = vtanh.pop %v1793
        %v1814 = vmul.f32 %v1810, %v1698
        %v1815 = vmul.f32 %v1808, %v1813
        %v1816 = vadd.f32 %v1814, %v1815
        %v1817 = vtanh.pop %v1816
        %v1818 = vmul.f32 %v1812, %v1817
        %s1819 = scalar_lea.vmem %s478, 48 [#allocation4]
        %1820 = vst [vmem:[%s1819] sm:$0xff] %v1818
        %s1821 = scalar_lea.vmem [#allocation2], 224
        %v1822 = vld [vmem:[%s1821] sm:$0xff]
        %v1823 = vld [vmem:[%s1821 + $0x8] sm:$0xff]
        %v1824 = vld [vmem:[%s1821 + $0x10] sm:$0xff]
        %v1825 = vld [vmem:[%s1821 + $0x18] sm:$0xff]
        %v1826 = vpack.c.bf16 %v1818, %v1818
        %1827 = vmatprep.subr.bf16.mxu0 %v967
        %1828 = vmatpush1.bf16.msra.mxu0 %v966
        %1829 = vmatprep.subr.bf16.mxu0 %v963
        %1830 = vmatpush1.bf16.msra.mxu0 %v962
        %1831 = vmatprep.subr.bf16.mxu0 %v959
        %1832 = vmatpush1.bf16.msra.mxu0 %v958
        %1833 = vmatprep.subr.bf16.mxu0 %v955
        %1834 = vmatpush1.bf16.msra.mxu0 %v954
        %1835 = vmatprep.subr.bf16.mxu0 %v951
        %1836 = vmatpush1.bf16.msra.mxu0 %v950
        %1837 = vmatprep.subr.bf16.mxu0 %v947
        %1838 = vmatpush1.bf16.msra.mxu0 %v946
        %1839 = vmatprep.subr.bf16.mxu0 %v943
        %1840 = vmatpush1.bf16.msra.mxu0 %v942
        %1841 = vmatprep.subr.bf16.mxu0 %v939
        %1842 = vmatpush1.bf16.msra.mxu0 %v938
        %1843 = vmatprep.subr.bf16.mxu0 0
        %1844 = vmatpush2.bf16.msra.mxu0 0
        %1845 = vmatprep.subr.bf16.mxu0 0
        %1846 = vmatpush2.bf16.msra.mxu0 0
        %1847 = vmatprep.subr.bf16.mxu0 0
        %1848 = vmatpush2.bf16.msra.mxu0 0
        %1849 = vmatprep.subr.bf16.mxu0 0
        %1850 = vmatpush2.bf16.msra.mxu0 0
        %1851 = vmatprep.subr.bf16.mxu0 0
        %1852 = vmatpush2.bf16.msra.mxu0 0
        %1853 = vmatprep.subr.bf16.mxu0 0
        %1854 = vmatpush2.bf16.msra.mxu0 0
        %1855 = vmatprep.subr.bf16.mxu0 0
        %1856 = vmatpush2.bf16.msra.mxu0 0
        %1857 = vmatprep.subr.bf16.mxu0 0
        %1858 = vmatpush2.bf16.msra.mxu0 0
        %1859 = vmatprep.mubr.bf16.mxu0 0
        %1860 = vmatmul.mubr.bf16.gmra.mxu0 %v1826
        %v1861 = vpop.f32.mrf.mxu0
        %v1862 = vadd.f32 0.0, %v1861
        %v1863 = vpop.f32.mrf.mxu0
        %v1864 = vadd.f32 0.0, %v1863
        %v1865 = vpop.f32.mrf.mxu0
        %v1866 = vpop.f32.mrf.mxu0
        %1867 = vdwg.mxu0
        %1868 = vmatprep.subr.bf16.mxu0 %v969
        %1869 = vmatpush1.bf16.msra.mxu0 %v968
        %1870 = vmatprep.subr.bf16.mxu0 %v965
        %1871 = vmatpush1.bf16.msra.mxu0 %v964
        %1872 = vmatprep.subr.bf16.mxu0 %v961
        %1873 = vmatpush1.bf16.msra.mxu0 %v960
        %1874 = vmatprep.subr.bf16.mxu0 %v957
        %1875 = vmatpush1.bf16.msra.mxu0 %v956
        %1876 = vmatprep.subr.bf16.mxu0 %v953
        %1877 = vmatpush1.bf16.msra.mxu0 %v952
        %1878 = vmatprep.subr.bf16.mxu0 %v949
        %1879 = vmatpush1.bf16.msra.mxu0 %v948
        %1880 = vmatprep.subr.bf16.mxu0 %v945
        %1881 = vmatpush1.bf16.msra.mxu0 %v944
        %1882 = vmatprep.subr.bf16.mxu0 %v941
        %1883 = vmatpush1.bf16.msra.mxu0 %v940
        %1884 = vmatprep.subr.bf16.mxu0 0
        %1885 = vmatpush2.bf16.msra.mxu0 0
        %1886 = vmatprep.subr.bf16.mxu0 0
        %1887 = vmatpush2.bf16.msra.mxu0 0
        %1888 = vmatprep.subr.bf16.mxu0 0
        %1889 = vmatpush2.bf16.msra.mxu0 0
        %1890 = vmatprep.subr.bf16.mxu0 0
        %1891 = vmatpush2.bf16.msra.mxu0 0
        %1892 = vmatprep.subr.bf16.mxu0 0
        %1893 = vmatpush2.bf16.msra.mxu0 0
        %1894 = vmatprep.subr.bf16.mxu0 0
        %1895 = vmatpush2.bf16.msra.mxu0 0
        %1896 = vmatprep.subr.bf16.mxu0 0
        %1897 = vmatpush2.bf16.msra.mxu0 0
        %1898 = vmatprep.subr.bf16.mxu0 0
        %1899 = vmatpush2.bf16.msra.mxu0 0
        %1900 = vmatprep.mubr.bf16.mxu0 0
        %1901 = vmatmul.mubr.bf16.gmra.mxu0 %v1826
        %v1902 = vpop.f32.mrf.mxu0
        %v1903 = vadd.f32 0.0, %v1902
        %v1904 = vpop.f32.mrf.mxu0
        %v1905 = vadd.f32 0.0, %v1904
        %v1906 = vpop.f32.mrf.mxu0
        %v1907 = vpop.f32.mrf.mxu0
        %1908 = vdwg.mxu0
        %v1909 = vadd.f32 %v1822, %v1862
        %v1910 = vadd.f32 %v1823, %v1864
        %v1911 = vadd.f32 %v1824, %v1903
        %v1912 = vadd.f32 %v1825, %v1905
        %v1913 = vxor.u32 %v1909, 2147483648
        %v1914 = vxor.u32 %v1910, 2147483648
        %v1915 = vxor.u32 %v1912, 2147483648
        %v1916 = vmul.f32 %v1913, 1.442695
        %v1917 = vpow.pop %v1916
        %v1918 = vmul.f32 %v1914, 1.442695
        %v1919 = vpow.pop %v1918
        %v1920 = vmul.f32 %v1915, 1.442695
        %v1921 = vpow.pop %v1920
        %v1922 = vadd.f32 %v1917, 1.0
        %v1923 = vadd.f32 %v1919, 1.0
        %v1924 = vadd.f32 %v1921, 1.0
        %v1925 = vrcp.pop %v1922
        %v1926 = vmul.f32 1.0, %v1925
        %v1927 = vrcp.pop %v1923
        %v1928 = vmul.f32 1.0, %v1927
        %v1929 = vrcp.pop %v1924
        %v1930 = vmul.f32 1.0, %v1929
        %v1931 = vtanh.pop %v1911
        %v1932 = vmul.f32 %v1928, %v1816
        %v1933 = vmul.f32 %v1926, %v1931
        %v1934 = vadd.f32 %v1932, %v1933
        %v1935 = vtanh.pop %v1934
        %v1936 = vmul.f32 %v1930, %v1935
        %s1937 = scalar_lea.vmem %s478, 56 [#allocation4]
        %1938 = vst [vmem:[%s1937] sm:$0xff] %v1936
        %v1939 = vld [vmem:[%s478] sm:$0xff]
        %v1940 = vld [vmem:[%s478 + $0x8] sm:$0xff]
        %v1941 = vld [vmem:[%s478 + $0x10] sm:$0xff]
        %v1942 = vld [vmem:[%s478 + $0x18] sm:$0xff]
        %v1943 = vld [vmem:[%s478 + $0x20] sm:$0xff]
        %v1944 = vld [vmem:[%s478 + $0x28] sm:$0xff]
        %v1945 = vld [vmem:[%s478 + $0x30] sm:$0xff]
        %v1946 = vld [vmem:[%s478 + $0x38] sm:$0xff]
        %v1947 = vpack.c.bf16 %v1940, %v1939
        %v1948 = vpack.c.bf16 %v1942, %v1941
        %v1949 = vpack.c.bf16 %v1944, %v1943
        %v1950 = vpack.c.bf16 %v1946, %v1945
        %v1951 = vld [vmem:[%s6] sm:$0xf]
        %v1952 = vld [vmem:[%s6 + $0x4] sm:$0xf]
        %v1953 = vld [vmem:[%s6 + $0x8] sm:$0xf]
        %v1954 = vld [vmem:[%s6 + $0xc] sm:$0xf]
        %v1955 = vld [vmem:[%s6 + $0x10] sm:$0xf]
        %v1956 = vld [vmem:[%s6 + $0x14] sm:$0xf]
        %v1957 = vld [vmem:[%s6 + $0x18] sm:$0xf]
        %v1958 = vld [vmem:[%s6 + $0x1c] sm:$0xf]
        %v1959 = vld [vmem:[%s6 + $0x20] sm:$0xf]
        %v1960 = vld [vmem:[%s6 + $0x24] sm:$0xf]
        %v1961 = vld [vmem:[%s6 + $0x28] sm:$0xf]
        %v1962 = vld [vmem:[%s6 + $0x2c] sm:$0xf]
        %v1963 = vld [vmem:[%s6 + $0x30] sm:$0xf]
        %v1964 = vld [vmem:[%s6 + $0x34] sm:$0xf]
        %v1965 = vld [vmem:[%s6 + $0x38] sm:$0xf]
        %v1966 = vld [vmem:[%s6 + $0x3c] sm:$0xf]
        %v1967 = vld [vmem:[%s7] sm:$0x1]
        %v1969 = vlaneseq
        %v1970 = vshrl.u32 %v1969, 7
        %v1971 = vsub.s32 0, %v1970
        %v1972 = vrot.slane %v1967, %v1971
        %v1990 = vunpack.c.l.b16 %v1951
        %v1991 = vunpack.c.l.b16 %v1952
        %v1992 = vunpack.c.l.b16 %v1953
        %v1993 = vunpack.c.l.b16 %v1954
        %v1994 = vunpack.c.l.b16 %v1955
        %v1995 = vunpack.c.l.b16 %v1956
        %v1996 = vunpack.c.l.b16 %v1957
        %v1997 = vunpack.c.l.b16 %v1958
        %v1998 = vunpack.c.l.b16 %v1959
        %v1999 = vunpack.c.l.b16 %v1960
        %v2000 = vunpack.c.l.b16 %v1961
        %v2001 = vunpack.c.l.b16 %v1962
        %v2002 = vunpack.c.l.b16 %v1963
        %v2003 = vunpack.c.l.b16 %v1964
        %v2004 = vunpack.c.l.b16 %v1965
        %v2005 = vunpack.c.l.b16 %v1966
        %v2006 = vpack.c.b16 %v1991, %v1990
        %v2007 = vpack.c.b16 %v1993, %v1992
        %v2008 = vpack.c.b16 %v1995, %v1994
        %v2009 = vpack.c.b16 %v1997, %v1996
        %v2010 = vpack.c.b16 %v1999, %v1998
        %v2011 = vpack.c.b16 %v2001, %v2000
        %v2012 = vpack.c.b16 %v2003, %v2002
        %v2013 = vpack.c.b16 %v2005, %v2004
        %2022 = vmatprep.subr.bf16.mxu0 0
        %2023 = vmatpush1.bf16.msra.mxu0 %v2013
        %2024 = vmatprep.subr.bf16.mxu0 0
        %2025 = vmatpush1.bf16.msra.mxu0 %v2012
        %2026 = vmatprep.subr.bf16.mxu0 0
        %2027 = vmatpush1.bf16.msra.mxu0 %v2011
        %2028 = vmatprep.subr.bf16.mxu0 0
        %2029 = vmatpush1.bf16.msra.mxu0 %v2010
        %2030 = vmatprep.subr.bf16.mxu0 0
        %2031 = vmatpush1.bf16.msra.mxu0 %v2009
        %2032 = vmatprep.subr.bf16.mxu0 0
        %2033 = vmatpush1.bf16.msra.mxu0 %v2008
        %2034 = vmatprep.subr.bf16.mxu0 0
        %2035 = vmatpush1.bf16.msra.mxu0 %v2007
        %2036 = vmatprep.subr.bf16.mxu0 0
        %2037 = vmatpush1.bf16.msra.mxu0 %v2006
        %2038 = vmatprep.subr.bf16.mxu0 0
        %2039 = vmatpush2.bf16.msra.mxu0 0
        %2040 = vmatprep.subr.bf16.mxu0 0
        %2041 = vmatpush2.bf16.msra.mxu0 0
        %2042 = vmatprep.subr.bf16.mxu0 0
        %2043 = vmatpush2.bf16.msra.mxu0 0
        %2044 = vmatprep.subr.bf16.mxu0 0
        %2045 = vmatpush2.bf16.msra.mxu0 0
        %2046 = vmatprep.subr.bf16.mxu0 0
        %2047 = vmatpush2.bf16.msra.mxu0 0
        %2048 = vmatprep.subr.bf16.mxu0 0
        %2049 = vmatpush2.bf16.msra.mxu0 0
        %2050 = vmatprep.subr.bf16.mxu0 0
        %2051 = vmatpush2.bf16.msra.mxu0 0
        %2052 = vmatprep.subr.bf16.mxu0 0
        %2053 = vmatpush2.bf16.msra.mxu0 0
        %2054 = vmatprep.mubr.bf16.mxu0 0
        %2055 = vmatmul.mubr.bf16.gmra.mxu0 %v1947
        %v2056 = vpop.f32.mrf.mxu0
        %v2057 = vadd.f32 %v1972, %v2056
        %v2058 = vpop.f32.mrf.mxu0
        %v2059 = vpop.f32.mrf.mxu0
        %v2060 = vadd.f32 %v1972, %v2059
        %v2061 = vpop.f32.mrf.mxu0
        %2062 = vmatprep.mubr.bf16.mxu0 0
        %2063 = vmatmul.mubr.bf16.gmra.mxu0 %v1948
        %v2064 = vpop.f32.mrf.mxu0
        %v2065 = vadd.f32 %v1972, %v2064
        %v2066 = vpop.f32.mrf.mxu0
        %v2067 = vpop.f32.mrf.mxu0
        %v2068 = vadd.f32 %v1972, %v2067
        %v2069 = vpop.f32.mrf.mxu0
        %2070 = vmatprep.mubr.bf16.mxu0 0
        %2071 = vmatmul.mubr.bf16.gmra.mxu0 %v1949
        %v2072 = vpop.f32.mrf.mxu0
        %v2073 = vadd.f32 %v1972, %v2072
        %v2074 = vpop.f32.mrf.mxu0
        %v2075 = vpop.f32.mrf.mxu0
        %v2076 = vadd.f32 %v1972, %v2075
        %v2077 = vpop.f32.mrf.mxu0
        %2078 = vmatprep.mubr.bf16.mxu0 0
        %2079 = vmatmul.mubr.bf16.gmra.mxu0 %v1950
        %v2080 = vpop.f32.mrf.mxu0
        %v2081 = vadd.f32 %v1972, %v2080
        %v2082 = vpop.f32.mrf.mxu0
        %v2083 = vpop.f32.mrf.mxu0
        %v2084 = vadd.f32 %v1972, %v2083
        %v2085 = vpop.f32.mrf.mxu0
        %2086 = vdwg.mxu0
        %2087 = vst [vmem:[%s484] sm:$0xff] %v2057
        %2088 = vst [vmem:[%s484 + $0x8] sm:$0xff] %v2060
        %2089 = vst [vmem:[%s484 + $0x10] sm:$0xff] %v2065
        %2090 = vst [vmem:[%s484 + $0x18] sm:$0xff] %v2068
        %2091 = vst [vmem:[%s484 + $0x20] sm:$0xff] %v2073
        %2092 = vst [vmem:[%s484 + $0x28] sm:$0xff] %v2076
        %2093 = vst [vmem:[%s484 + $0x30] sm:$0xff] %v2081
        %2094 = vst [vmem:[%s484 + $0x38] sm:$0xff] %v2084
        %2095 = vst [vmem:[%s508] sm:$0xff] %v1936
        %2096 = vst [vmem:[%s512] sm:$0xff] %v1934
        %s2097 = sand.u32 %s214, 1
        %s2098 = sand.u32 %s214, 1
        %s2099 = smul.addr %s2098, 64
        %s2100 = scalar_lea.vmem [#allocation4], %s2099
        %s2101 = sand.u32 %s240, 1
        %s2102 = sand.u32 %s240, 1
        %s2103 = smul.addr %s2102, 64
        %s2104 = scalar_lea.vmem [#allocation5], %s2103
        %p2105 = scmp.lt.s32.totalorder %s23, 1
        %s2106 = scalar_select %p2105, %s23, 1
        %s2107 = smul.addr %s2106, 8
        %s2108 = scalar_lea.vmem %s10, %s2107
        %p2109 = scmp.lt.s32.totalorder %s23, 1
        %s2110 = scalar_select %p2109, %s23, 1
        %s2111 = smul.addr %s2110, 8
        %s2112 = scalar_lea.vmem %s11, %s2111
        // Predicated region
        $region94: #{dkt_forward.1} parent=88 // pred_check
          %p2113 = pneg %p224
        $region95: #{dkt_forward.1} parent=88 // pred_check_branch
          %2115 = sbr.rel (%p2113) target = $region97
        $region96: #{dkt_forward.1} parent=88 // pred_region
          %s2116 = smul.addr %s23, 8
          %s2117 = scalar_lea.vmem %s8, %s2116
          // Predicated region
          $region98: #{dkt_forward.1} parent=96 // pred_check
            _
          $region99: #{dkt_forward.1} parent=96 // pred_check_branch
            %2119 = sbr.rel (0) target = $region101
          $region100: #{dkt_forward.1} parent=96 // pred_region
            // Predicated region
            $region102: #{dkt_forward.1} parent=100 // pred_check
              _
            $region103: #{dkt_forward.1} parent=100 // pred_check_branch
              %2121 = sbr.rel (0) target = $region105
            $region104: #{dkt_forward.1} parent=100 // pred_region
              // Predicated region
              $region117: #{dkt_forward.1} parent=104 // pred_check
                _
              $region118: #{dkt_forward.1} parent=104 // pred_check_branch
                %2151 = sbr.rel (0) target = $region120
              $region119: #{dkt_forward.1} parent=104 // pred_region
                loop: start=0, step=1, limit=1
                $region121: #{dkt_forward.1} parent=119 // loop_pre_header
                  _
                $region122: #{dkt_forward.1} parent=119 // loop_header
                  %s2153 = sphi 0, %s2157
                  %p2154 = scmp.ge.s32.totalorder %s2153, 1
                  %s2158 = sphi %s2100, %s2100
                  %s2159 = sphi %s2117, %s2117
                $region123: #{dkt_forward.1} parent=119 // loop_header_branch
                  %2156 = sbr.rel (%p2154) target = $region127
                $region124: #{dkt_forward.1} parent=119 // loop_body
                  %v2160 = vld [vmem:[%s2158] sm:$0xff]
                  %2161 = vst [vmem:[%s2159] sm:$0xff] %v2160
                  %v2162 = vld [vmem:[%s2158 + $0x8] sm:$0xff]
                  %2163 = vst [vmem:[%s2159 + $0x10] sm:$0xff] %v2162
                  %v2164 = vld [vmem:[%s2158 + $0x10] sm:$0xff]
                  %2165 = vst [vmem:[%s2159 + $0x20] sm:$0xff] %v2164
                  %v2166 = vld [vmem:[%s2158 + $0x18] sm:$0xff]
                  %2167 = vst [vmem:[%s2159 + $0x30] sm:$0xff] %v2166
                  %v2168 = vld [vmem:[%s2158 + $0x20] sm:$0xff]
                  %2169 = vst [vmem:[%s2159 + $0x40] sm:$0xff] %v2168
                  %v2170 = vld [vmem:[%s2158 + $0x28] sm:$0xff]
                  %2171 = vst [vmem:[%s2159 + $0x50] sm:$0xff] %v2170
                  %v2172 = vld [vmem:[%s2158 + $0x30] sm:$0xff]
                  %2173 = vst [vmem:[%s2159 + $0x60] sm:$0xff] %v2172
                  %v2174 = vld [vmem:[%s2158 + $0x38] sm:$0xff]
                  %2175 = vst [vmem:[%s2159 + $0x70] sm:$0xff] %v2174
                $region125: #{dkt_forward.1} parent=119 // loop_footer
                  %s2157 = sadd.s32 1, %s2153
                $region126: #{dkt_forward.1} parent=119 // loop_footer_branch
                  %2152 = sbr.rel target = $region122
                $region127: #{dkt_forward.1} parent=119 // loop_exit
                  _
              $region120: #{dkt_forward.1} parent=104 // pred_fallthru
                _
              // Predicated region
              $region128: #{dkt_forward.1} parent=104 // pred_check
                _
              $region129: #{dkt_forward.1} parent=104 // pred_check_branch
                %2177 = sbr.rel target = $region131
              $region130: #{dkt_forward.1} parent=104 // pred_region
                _
              $region131: #{dkt_forward.1} parent=104 // pred_fallthru
                _
            $region105: #{dkt_forward.1} parent=100 // pred_fallthru
              _
            // Predicated region
            $region106: #{dkt_forward.1} parent=100 // pred_check
              _
            $region107: #{dkt_forward.1} parent=100 // pred_check_branch
              %2123 = sbr.rel target = $region109
            $region108: #{dkt_forward.1} parent=100 // pred_region
              %s2125 = ssub.s32 256, 1
              loop: start=0, step=1, limit=1
              $region110: #{dkt_forward.1} parent=108 // loop_pre_header
                _
              $region111: #{dkt_forward.1} parent=108 // loop_header
                %s2127 = sphi 0, %s2131
                %p2128 = scmp.ge.s32.totalorder %s2127, 1
                %s2132 = sphi %s2100, %s2100
                %s2133 = sphi %s2117, %s2117
              $region112: #{dkt_forward.1} parent=108 // loop_header_branch
                %2130 = sbr.rel (%p2128) target = $region116
              $region113: #{dkt_forward.1} parent=108 // loop_body
                %v2134 = vld [vmem:[%s2132] sm:%s2125]
                %2135 = vst [vmem:[%s2133] sm:%s2125] %v2134
                %v2136 = vld [vmem:[%s2132 + $0x8] sm:%s2125]
                %2137 = vst [vmem:[%s2133 + $0x10] sm:%s2125] %v2136
                %v2138 = vld [vmem:[%s2132 + $0x10] sm:%s2125]
                %2139 = vst [vmem:[%s2133 + $0x20] sm:%s2125] %v2138
                %v2140 = vld [vmem:[%s2132 + $0x18] sm:%s2125]
                %2141 = vst [vmem:[%s2133 + $0x30] sm:%s2125] %v2140
                %v2142 = vld [vmem:[%s2132 + $0x20] sm:%s2125]
                %2143 = vst [vmem:[%s2133 + $0x40] sm:%s2125] %v2142
                %v2144 = vld [vmem:[%s2132 + $0x28] sm:%s2125]
                %2145 = vst [vmem:[%s2133 + $0x50] sm:%s2125] %v2144
                %v2146 = vld [vmem:[%s2132 + $0x30] sm:%s2125]
                %2147 = vst [vmem:[%s2133 + $0x60] sm:%s2125] %v2146
                %v2148 = vld [vmem:[%s2132 + $0x38] sm:%s2125]
                %2149 = vst [vmem:[%s2133 + $0x70] sm:%s2125] %v2148
              $region114: #{dkt_forward.1} parent=108 // loop_footer
                %s2131 = sadd.s32 1, %s2127
              $region115: #{dkt_forward.1} parent=108 // loop_footer_branch
                %2126 = sbr.rel target = $region111
              $region116: #{dkt_forward.1} parent=108 // loop_exit
                _
            $region109: #{dkt_forward.1} parent=100 // pred_fallthru
              _
          $region101: #{dkt_forward.1} parent=96 // pred_fallthru
            _
          %2178 = vnop
        $region97: #{dkt_forward.1} parent=88 // pred_fallthru
          _
        // Predicated region
        $region132: #{dkt_forward.1} parent=88 // pred_check
          %p2179 = pneg %p250
        $region133: #{dkt_forward.1} parent=88 // pred_check_branch
          %2181 = sbr.rel (%p2179) target = $region135
        $region134: #{dkt_forward.1} parent=88 // pred_region
          %s2182 = smul.addr %s23, 8
          %s2183 = scalar_lea.vmem %s9, %s2182
          // Predicated region
          $region136: #{dkt_forward.1} parent=134 // pred_check
            _
          $region137: #{dkt_forward.1} parent=134 // pred_check_branch
            %2185 = sbr.rel (0) target = $region139
          $region138: #{dkt_forward.1} parent=134 // pred_region
            // Predicated region
            $region140: #{dkt_forward.1} parent=138 // pred_check
              _
            $region141: #{dkt_forward.1} parent=138 // pred_check_branch
              %2187 = sbr.rel (0) target = $region143
            $region142: #{dkt_forward.1} parent=138 // pred_region
              // Predicated region
              $region155: #{dkt_forward.1} parent=142 // pred_check
                _
              $region156: #{dkt_forward.1} parent=142 // pred_check_branch
                %2217 = sbr.rel (0) target = $region158
              $region157: #{dkt_forward.1} parent=142 // pred_region
                loop: start=0, step=1, limit=1
                $region159: #{dkt_forward.1} parent=157 // loop_pre_header
                  _
                $region160: #{dkt_forward.1} parent=157 // loop_header
                  %s2219 = sphi 0, %s2223
                  %p2220 = scmp.ge.s32.totalorder %s2219, 1
                  %s2224 = sphi %s2104, %s2104
                  %s2225 = sphi %s2183, %s2183
                $region161: #{dkt_forward.1} parent=157 // loop_header_branch
                  %2222 = sbr.rel (%p2220) target = $region165
                $region162: #{dkt_forward.1} parent=157 // loop_body
                  %v2226 = vld [vmem:[%s2224] sm:$0xff]
                  %2227 = vst [vmem:[%s2225] sm:$0xff] %v2226
                  %v2228 = vld [vmem:[%s2224 + $0x8] sm:$0xff]
                  %2229 = vst [vmem:[%s2225 + $0x10] sm:$0xff] %v2228
                  %v2230 = vld [vmem:[%s2224 + $0x10] sm:$0xff]
                  %2231 = vst [vmem:[%s2225 + $0x20] sm:$0xff] %v2230
                  %v2232 = vld [vmem:[%s2224 + $0x18] sm:$0xff]
                  %2233 = vst [vmem:[%s2225 + $0x30] sm:$0xff] %v2232
                  %v2234 = vld [vmem:[%s2224 + $0x20] sm:$0xff]
                  %2235 = vst [vmem:[%s2225 + $0x40] sm:$0xff] %v2234
                  %v2236 = vld [vmem:[%s2224 + $0x28] sm:$0xff]
                  %2237 = vst [vmem:[%s2225 + $0x50] sm:$0xff] %v2236
                  %v2238 = vld [vmem:[%s2224 + $0x30] sm:$0xff]
                  %2239 = vst [vmem:[%s2225 + $0x60] sm:$0xff] %v2238
                  %v2240 = vld [vmem:[%s2224 + $0x38] sm:$0xff]
                  %2241 = vst [vmem:[%s2225 + $0x70] sm:$0xff] %v2240
                $region163: #{dkt_forward.1} parent=157 // loop_footer
                  %s2223 = sadd.s32 1, %s2219
                $region164: #{dkt_forward.1} parent=157 // loop_footer_branch
                  %2218 = sbr.rel target = $region160
                $region165: #{dkt_forward.1} parent=157 // loop_exit
                  _
              $region158: #{dkt_forward.1} parent=142 // pred_fallthru
                _
              // Predicated region
              $region166: #{dkt_forward.1} parent=142 // pred_check
                _
              $region167: #{dkt_forward.1} parent=142 // pred_check_branch
                %2243 = sbr.rel target = $region169
              $region168: #{dkt_forward.1} parent=142 // pred_region
                _
              $region169: #{dkt_forward.1} parent=142 // pred_fallthru
                _
            $region143: #{dkt_forward.1} parent=138 // pred_fallthru
              _
            // Predicated region
            $region144: #{dkt_forward.1} parent=138 // pred_check
              _
            $region145: #{dkt_forward.1} parent=138 // pred_check_branch
              %2189 = sbr.rel target = $region147
            $region146: #{dkt_forward.1} parent=138 // pred_region
              %s2191 = ssub.s32 256, 1
              loop: start=0, step=1, limit=1
              $region148: #{dkt_forward.1} parent=146 // loop_pre_header
                _
              $region149: #{dkt_forward.1} parent=146 // loop_header
                %s2193 = sphi 0, %s2197
                %p2194 = scmp.ge.s32.totalorder %s2193, 1
                %s2198 = sphi %s2104, %s2104
                %s2199 = sphi %s2183, %s2183
              $region150: #{dkt_forward.1} parent=146 // loop_header_branch
                %2196 = sbr.rel (%p2194) target = $region154
              $region151: #{dkt_forward.1} parent=146 // loop_body
                %v2200 = vld [vmem:[%s2198] sm:%s2191]
                %2201 = vst [vmem:[%s2199] sm:%s2191] %v2200
                %v2202 = vld [vmem:[%s2198 + $0x8] sm:%s2191]
                %2203 = vst [vmem:[%s2199 + $0x10] sm:%s2191] %v2202
                %v2204 = vld [vmem:[%s2198 + $0x10] sm:%s2191]
                %2205 = vst [vmem:[%s2199 + $0x20] sm:%s2191] %v2204
                %v2206 = vld [vmem:[%s2198 + $0x18] sm:%s2191]
                %2207 = vst [vmem:[%s2199 + $0x30] sm:%s2191] %v2206
                %v2208 = vld [vmem:[%s2198 + $0x20] sm:%s2191]
                %2209 = vst [vmem:[%s2199 + $0x40] sm:%s2191] %v2208
                %v2210 = vld [vmem:[%s2198 + $0x28] sm:%s2191]
                %2211 = vst [vmem:[%s2199 + $0x50] sm:%s2191] %v2210
                %v2212 = vld [vmem:[%s2198 + $0x30] sm:%s2191]
                %2213 = vst [vmem:[%s2199 + $0x60] sm:%s2191] %v2212
                %v2214 = vld [vmem:[%s2198 + $0x38] sm:%s2191]
                %2215 = vst [vmem:[%s2199 + $0x70] sm:%s2191] %v2214
              $region152: #{dkt_forward.1} parent=146 // loop_footer
                %s2197 = sadd.s32 1, %s2193
              $region153: #{dkt_forward.1} parent=146 // loop_footer_branch
                %2192 = sbr.rel target = $region149
              $region154: #{dkt_forward.1} parent=146 // loop_exit
                _
            $region147: #{dkt_forward.1} parent=138 // pred_fallthru
              _
          $region139: #{dkt_forward.1} parent=134 // pred_fallthru
            _
          %2244 = vnop
        $region135: #{dkt_forward.1} parent=88 // pred_fallthru
          _
        // Predicated region
        $region170: #{dkt_forward.1} parent=88 // pred_check
          %p2245 = pneg %p276
        $region171: #{dkt_forward.1} parent=88 // pred_check_branch
          %2247 = sbr.rel (%p2245) target = $region173
        $region172: #{dkt_forward.1} parent=88 // pred_region
          _
        $region173: #{dkt_forward.1} parent=88 // pred_fallthru
          _
        // Predicated region
        $region174: #{dkt_forward.1} parent=88 // pred_check
          %p2248 = pneg %p302
        $region175: #{dkt_forward.1} parent=88 // pred_check_branch
          %2250 = sbr.rel (%p2248) target = $region177
        $region176: #{dkt_forward.1} parent=88 // pred_region
          _
        $region177: #{dkt_forward.1} parent=88 // pred_fallthru
          _
      $region89: #{dkt_forward.1} parent=5 // pred_fallthru
        _
      %p2251 = scmp.le.s32.totalorder 2, %s18
      // Predicated region
      $region178: #{dkt_forward.1} parent=5 // pred_check
        %p2252 = pneg %p2251
      $region179: #{dkt_forward.1} parent=5 // pred_check_branch
        %2254 = sbr.rel (%p2252) target = $region181
      $region180: #{dkt_forward.1} parent=5 // pred_region
        %s2255 = ssub.s32 %s18, 2
        // Predicated region
        $region182: #{dkt_forward.1} parent=180 // pred_check
          %p2256 = pneg %p230
        $region183: #{dkt_forward.1} parent=180 // pred_check_branch
          %2258 = sbr.rel (%p2256) target = $region185
        $region184: #{dkt_forward.1} parent=180 // pred_region
          %s2259 = sand.u32 %s215, 1
          %s2260 = sand.u32 %s215, 1
          %s2261 = smul.addr %s2260, 64
          %s2262 = scalar_lea.vmem [#allocation4], %s2261
        $region185: #{dkt_forward.1} parent=180 // pred_fallthru
          _
        // Predicated region
        $region186: #{dkt_forward.1} parent=180 // pred_check
          %p2263 = pneg %p256
        $region187: #{dkt_forward.1} parent=180 // pred_check_branch
          %2265 = sbr.rel (%p2263) target = $region189
        $region188: #{dkt_forward.1} parent=180 // pred_region
          %s2266 = sand.u32 %s241, 1
          %s2267 = sand.u32 %s241, 1
          %s2268 = smul.addr %s2267, 64
          %s2269 = scalar_lea.vmem [#allocation5], %s2268
        $region189: #{dkt_forward.1} parent=180 // pred_fallthru
          _
        // Predicated region
        $region190: #{dkt_forward.1} parent=180 // pred_check
          %p2270 = pneg %p282
        $region191: #{dkt_forward.1} parent=180 // pred_check_branch
          %2272 = sbr.rel (%p2270) target = $region193
        $region192: #{dkt_forward.1} parent=180 // pred_region
          %p2273 = scmp.lt.s32.totalorder %s24, 1
          %s2274 = scalar_select %p2273, %s24, 1
          %s2275 = smul.addr %s2274, 8
          %s2276 = scalar_lea.vmem %s10, %s2275
        $region193: #{dkt_forward.1} parent=180 // pred_fallthru
          _
        // Predicated region
        $region194: #{dkt_forward.1} parent=180 // pred_check
          %p2277 = pneg %p308
        $region195: #{dkt_forward.1} parent=180 // pred_check_branch
          %2279 = sbr.rel (%p2277) target = $region197
        $region196: #{dkt_forward.1} parent=180 // pred_region
          %p2280 = scmp.lt.s32.totalorder %s24, 1
          %s2281 = scalar_select %p2280, %s24, 1
          %s2282 = smul.addr %s2281, 8
          %s2283 = scalar_lea.vmem %s11, %s2282
        $region197: #{dkt_forward.1} parent=180 // pred_fallthru
          _
      $region181: #{dkt_forward.1} parent=5 // pred_fallthru
        _
    $region6: #{dkt_forward.1} parent=1 // loop_footer
      %s22 = sadd.s32 1, %s18
    $region7: #{dkt_forward.1} parent=1 // loop_footer_branch
      %17 = sbr.rel target = $region3
    $region8: #{dkt_forward.1} parent=1 // loop_exit
      _

</llo_original>
